<compile_context>
chip_gen: v6e
topology: v6e:2x2x1
jax: 0.10.0
libtpu: 0.0.40
codegen_flags: <defaults>
</compile_context>

<pallas_src>
import jax
import jax.numpy as jnp
from jax.experimental import pallas as pl
from jax.experimental.pallas import tpu as pltpu

LN_EPS = 1e-5  # nn.LayerNorm default


def _gelu_tanh(t):
    # TODO(synk): PyTorch nn.GELU() defaults to the exact erf form; the tanh
    # approximation is used here for a portable EUP-only (tanh) lowering.
    return 0.5 * t * (1.0 + jnp.tanh(0.7978845608028654 * (t + 0.044715 * t * t * t)))


def _layernorm_last(t):
    # LayerNorm over the last axis, elementwise_affine=False.
    mu = jnp.mean(t, axis=-1, keepdims=True)
    d = t - mu
    var = jnp.mean(d * d, axis=-1, keepdims=True)
    return d * jax.lax.rsqrt(var + LN_EPS)


def _band(n):
    # Tri-diagonal ones matrix: 3-wide neighbour-sum operator (zero pad at edges).
    i = jnp.arange(n)
    return (jnp.abs(i[:, None] - i[None, :]) <= 1).astype(jnp.float32)


def block_kernel(x_ref, a_h_ref, a_w_ref, inv_cnt_ref,
                 w1_ref, b1_ref, w2_ref, b2_ref, o_ref):
    x = x_ref[...]                                   # (TB, H, W) float32
    tb, hh, _ = x.shape

    # ---- token mixer: LN -> (3x3 avg pool - identity) -> residual ----------
    y = _layernorm_last(x)

    # 3x3 avg pool (stride 1, pad 1, count_include_pad=False) as two banded
    # matmuls on the MXU: vertical 3-neighbour sum, then horizontal.
    a_hb = jnp.broadcast_to(a_h_ref[...], (tb, hh, hh))          # (TB, H, H)
    s = jnp.einsum('bhk,bkw->bhw', a_hb, y,
                   preferred_element_type=jnp.float32)           # vertical sum
    s = jnp.einsum('bhw,wl->bhl', s, a_w_ref[...],
                   preferred_element_type=jnp.float32)           # horizontal sum
    pooled = s * inv_cnt_ref[...]                                # / valid window size
    u = x + (pooled - y)                                         # residual 1

    # ---- channel mixer: LN -> Linear -> GELU -> Linear -> residual ---------
    z = _layernorm_last(u)
    h = jnp.einsum('bhw,wf->bhf', z, w1_ref[...],
                   preferred_element_type=jnp.float32) + b1_ref[...]
    h = _gelu_tanh(h)
    m = jnp.einsum('bhf,fw->bhw', h, w2_ref[...],
                   preferred_element_type=jnp.float32)
    o_ref[...] = u + m + b2_ref[...]                             # residual 2


def _pick_block_rows(num_rows, slab_bytes, vmem_budget=4 * 1024 * 1024):
    # x + out, each double-buffered by the pipeline -> ~4 * block * slab_bytes.
    cap = max(1, vmem_budget // (4 * slab_bytes))
    if num_rows >= 2:
        cap = min(cap, max(1, num_rows // 2))  # keep >= 2 grid steps (v7x: 2 TCs)
    tb = 1
    for d in range(1, min(cap, num_rows) + 1):
        if num_rows % d == 0:
            tb = d
    return tb


def poolformer_block(x, w1, b1, w2, b2, *, block_rows=None):
    """PoolFormer Block forward.

    x : (..., H, W) float32 with W == dim (LayerNorm / MLP act on the last axis,
        AvgPool2d on the last two axes, exactly like the PyTorch forward).
    w1, b1, w2, b2 : PyTorch Linear layouts (hidden, dim), (hidden,),
        (dim, hidden), (dim,).
    """
    orig_shape = x.shape
    H, W = orig_shape[-2], orig_shape[-1]
    dim = W
    hidden = w1.shape[0]
    assert w1.shape == (hidden, dim) and w2.shape == (dim, hidden)

    rows = 1
    for s in orig_shape[:-2]:
        rows *= s
    xf = x.reshape(rows, H, W).astype(jnp.float32)     # free reshape, no transpose

    # Pool operators (computed once per call, O(H^2 + W^2)).
    a_h = _band(H)                                     # (H, H)
    a_w = _band(W)                                     # (W, W)
    inv_cnt = (1.0 / (a_h.sum(1)[:, None] * a_w.sum(1)[None, :])).reshape(1, H, W)

    w1_t = w1.T.astype(jnp.float32)                    # (dim, hidden)
    w2_t = w2.T.astype(jnp.float32)                    # (hidden, dim)
    b1_r = b1.reshape(1, 1, hidden).astype(jnp.float32)
    b2_r = b2.reshape(1, 1, dim).astype(jnp.float32)

    if block_rows is None:
        block_rows = _pick_block_rows(rows, H * W * 4)
    assert rows % block_rows == 0
    grid = (rows // block_rows,)

    def rep(shape):
        return pl.BlockSpec(shape, lambda i, _s=len(shape): (0,) * _s)

    out = pl.pallas_call(
        block_kernel,
        out_shape=jax.ShapeDtypeStruct((rows, H, W), jnp.float32),
        grid=grid,
        in_specs=[
            pl.BlockSpec((block_rows, H, W), lambda i: (i, 0, 0)),   # x slab
            rep((H, H)),                                             # vertical band
            rep((W, W)),                                             # horizontal band
            rep((1, H, W)),                                          # 1/valid-count
            rep((dim, hidden)), rep((1, 1, hidden)),                 # Linear 1
            rep((hidden, dim)), rep((1, 1, dim)),                    # Linear 2
        ],
        out_specs=pl.BlockSpec((block_rows, H, W), lambda i: (i, 0, 0)),
        compiler_params=pltpu.CompilerParams(dimension_semantics=("parallel",)),
    )(xf, a_h, a_w, inv_cnt, w1_t, b1_r, w2_t, b2_r)
    return out.reshape(orig_shape)


def poolformer_block_ref(x, w1, b1, w2, b2):
    """Pure-JAX reference (pad-and-shift pooling) for correctness checking."""
    H, W = x.shape[-2], x.shape[-1]
    y = _layernorm_last(x)
    yf = y.reshape(-1, H, W)
    yp = jnp.pad(yf, ((0, 0), (1, 1), (1, 1)))
    s = sum(yp[:, di:di + H, dj:dj + W] for di in range(3) for dj in range(3))
    cnt = _band(H).sum(1)[:, None] * _band(W).sum(1)[None, :]
    pooled = (s / cnt).reshape(x.shape)
    u = x + (pooled - y)

    z = _layernorm_last(u)
    h = _gelu_tanh(z @ w1.T + b1)
    return u + h @ w2.T + b2


if __name__ == "__main__":
    # batch=2, channels=4, spatial=16x16; dim = last axis = 16, mlp_ratio = 4.
    B, C, H, W = 2, 4, 16, 16
    dim = W
    hidden = int(dim * 4.0)

    key = jax.random.PRNGKey(0)
    kx, k1, k2, k3, k4 = jax.random.split(key, 5)
    x = jax.random.normal(kx, (B, C, H, W), jnp.float32)
    w1 = 0.2 * jax.random.normal(k1, (hidden, dim), jnp.float32)
    b1 = 0.05 * jax.random.normal(k2, (hidden,), jnp.float32)
    w2 = 0.2 * jax.random.normal(k3, (dim, hidden), jnp.float32)
    b2 = 0.05 * jax.random.normal(k4, (dim,), jnp.float32)

    out = poolformer_block(x, w1, b1, w2, b2)
    out = jax.block_until_ready(out)

    ref = poolformer_block_ref(x, w1, b1, w2, b2)
    assert out.shape == x.shape
    assert jnp.allclose(out, ref, rtol=2e-4, atol=2e-4), float(jnp.max(jnp.abs(out - ref)))

    print("KERNEL_OK")
</pallas_src>

<mosaic_0001>
module attributes {stable_mosaic.version = 11 : i64} {
  func.func @block_kernel(%arg0: i32, %arg1: memref<4x16x16xf32, #tpu.memory_space<vmem>>, %arg2: memref<16x16xf32, #tpu.memory_space<vmem>>, %arg3: memref<16x16xf32, #tpu.memory_space<vmem>>, %arg4: memref<1x16x16xf32, #tpu.memory_space<vmem>>, %arg5: memref<16x64xf32, #tpu.memory_space<vmem>>, %arg6: memref<1x1x64xf32, #tpu.memory_space<vmem>>, %arg7: memref<64x16xf32, #tpu.memory_space<vmem>>, %arg8: memref<1x1x16xf32, #tpu.memory_space<vmem>>, %arg9: memref<4x16x16xf32, #tpu.memory_space<vmem>>) attributes {dimension_semantics = [#tpu.dimension_semantics<parallel>], iteration_bounds = array<i64: 2>, scalar_prefetch = 0 : i64, scratch_operands = 0 : i64, tpu.core_type = #tpu.core_type<tc>, window_params = [{transform_indices = @transform_0, window_bounds = array<i64: 4, 16, 16>}, {pipeline_mode = #tpu.pipeline_mode<synchronous>, transform_indices = @transform_1, window_bounds = array<i64: 16, 16>}, {pipeline_mode = #tpu.pipeline_mode<synchronous>, transform_indices = @transform_2, window_bounds = array<i64: 16, 16>}, {pipeline_mode = #tpu.pipeline_mode<synchronous>, transform_indices = @transform_3, window_bounds = array<i64: 1, 16, 16>}, {pipeline_mode = #tpu.pipeline_mode<synchronous>, transform_indices = @transform_4, window_bounds = array<i64: 16, 64>}, {pipeline_mode = #tpu.pipeline_mode<synchronous>, transform_indices = @transform_5, window_bounds = array<i64: 1, 1, 64>}, {pipeline_mode = #tpu.pipeline_mode<synchronous>, transform_indices = @transform_6, window_bounds = array<i64: 64, 16>}, {pipeline_mode = #tpu.pipeline_mode<synchronous>, transform_indices = @transform_7, window_bounds = array<i64: 1, 1, 16>}, {transform_indices = @transform_8, window_bounds = array<i64: 4, 16, 16>}]} {
    %c0 = arith.constant 0 : index
    %c0_0 = arith.constant 0 : index
    %c0_1 = arith.constant 0 : index
    %0 = vector.load %arg1[%c0, %c0_0, %c0_1] : memref<4x16x16xf32, #tpu.memory_space<vmem>>, vector<4x16x16xf32>
    %cst = arith.constant dense<0.000000e+00> : vector<4x16xf32>
    %1 = vector.multi_reduction <add>, %0, %cst [2] : vector<4x16x16xf32> to vector<4x16xf32>
    %2 = vector.shape_cast %1 : vector<4x16xf32> to vector<4x16x1xf32>
    %cst_2 = arith.constant 1.600000e+01 : f32
    %3 = vector.broadcast %cst_2 : f32 to vector<4x16x1xf32>
    %4 = arith.divf %2, %3 : vector<4x16x1xf32>
    %5 = vector.broadcast %4 : vector<4x16x1xf32> to vector<4x16x16xf32>
    %6 = arith.subf %0, %5 : vector<4x16x16xf32>
    %7 = arith.mulf %6, %6 : vector<4x16x16xf32>
    %cst_3 = arith.constant dense<0.000000e+00> : vector<4x16xf32>
    %8 = vector.multi_reduction <add>, %7, %cst_3 [2] : vector<4x16x16xf32> to vector<4x16xf32>
    %9 = vector.shape_cast %8 : vector<4x16xf32> to vector<4x16x1xf32>
    %cst_4 = arith.constant 1.600000e+01 : f32
    %10 = vector.broadcast %cst_4 : f32 to vector<4x16x1xf32>
    %11 = arith.divf %9, %10 : vector<4x16x1xf32>
    %cst_5 = arith.constant 9.99999974E-6 : f32
    %12 = vector.broadcast %cst_5 : f32 to vector<4x16x1xf32>
    %13 = arith.addf %11, %12 : vector<4x16x1xf32>
    %14 = math.rsqrt %13 : vector<4x16x1xf32>
    %15 = vector.broadcast %14 : vector<4x16x1xf32> to vector<4x16x16xf32>
    %16 = arith.mulf %6, %15 : vector<4x16x16xf32>
    %c0_6 = arith.constant 0 : index
    %c0_7 = arith.constant 0 : index
    %17 = vector.load %arg2[%c0_6, %c0_7] : memref<16x16xf32, #tpu.memory_space<vmem>>, vector<16x16xf32>
    %18 = vector.shape_cast %17 : vector<16x16xf32> to vector<1x16x16xf32>
    %19 = vector.broadcast %18 : vector<1x16x16xf32> to vector<4x16x16xf32>
    "tpu.trace_start"() <{level = 10 : i32, message = "bhk,bkw->bhw"}> : () -> ()
    %cst_8 = arith.constant dense<0.000000e+00> : vector<4x16x16xf32>
    %20 = tpu.matmul %19, %16, %cst_8 {dimension_numbers = #tpu.dot_dimension_numbers<[2], [1], [1], [2], [0, 0, 0, 1, 1, 2], [0], [0]>} : vector<4x16x16xf32>, vector<4x16x16xf32>, vector<4x16x16xf32> -> vector<4x16x16xf32>
    "tpu.trace_stop"() : () -> ()
    %c0_9 = arith.constant 0 : index
    %c0_10 = arith.constant 0 : index
    %21 = vector.load %arg3[%c0_9, %c0_10] : memref<16x16xf32, #tpu.memory_space<vmem>>, vector<16x16xf32>
    "tpu.trace_start"() <{level = 10 : i32, message = "bhw,wl->bhl"}> : () -> ()
    %cst_11 = arith.constant dense<0.000000e+00> : vector<4x16x16xf32>
    %22 = tpu.matmul %20, %21, %cst_11 {dimension_numbers = #tpu.dot_dimension_numbers<[2], [0], [0, 1], [1], [0, 0, 0, 1, 1, 1], [], []>} : vector<4x16x16xf32>, vector<16x16xf32>, vector<4x16x16xf32> -> vector<4x16x16xf32>
    "tpu.trace_stop"() : () -> ()
    %c0_12 = arith.constant 0 : index
    %c0_13 = arith.constant 0 : index
    %c0_14 = arith.constant 0 : index
    %23 = vector.load %arg4[%c0_12, %c0_13, %c0_14] : memref<1x16x16xf32, #tpu.memory_space<vmem>>, vector<1x16x16xf32>
    %24 = vector.broadcast %23 : vector<1x16x16xf32> to vector<4x16x16xf32>
    %25 = arith.mulf %22, %24 : vector<4x16x16xf32>
    %26 = arith.subf %25, %16 : vector<4x16x16xf32>
    %27 = arith.addf %0, %26 : vector<4x16x16xf32>
    %cst_15 = arith.constant dense<0.000000e+00> : vector<4x16xf32>
    %28 = vector.multi_reduction <add>, %27, %cst_15 [2] : vector<4x16x16xf32> to vector<4x16xf32>
    %29 = vector.shape_cast %28 : vector<4x16xf32> to vector<4x16x1xf32>
    %cst_16 = arith.constant 1.600000e+01 : f32
    %30 = vector.broadcast %cst_16 : f32 to vector<4x16x1xf32>
    %31 = arith.divf %29, %30 : vector<4x16x1xf32>
    %32 = vector.broadcast %31 : vector<4x16x1xf32> to vector<4x16x16xf32>
    %33 = arith.subf %27, %32 : vector<4x16x16xf32>
    %34 = arith.mulf %33, %33 : vector<4x16x16xf32>
    %cst_17 = arith.constant dense<0.000000e+00> : vector<4x16xf32>
    %35 = vector.multi_reduction <add>, %34, %cst_17 [2] : vector<4x16x16xf32> to vector<4x16xf32>
    %36 = vector.shape_cast %35 : vector<4x16xf32> to vector<4x16x1xf32>
    %cst_18 = arith.constant 1.600000e+01 : f32
    %37 = vector.broadcast %cst_18 : f32 to vector<4x16x1xf32>
    %38 = arith.divf %36, %37 : vector<4x16x1xf32>
    %cst_19 = arith.constant 9.99999974E-6 : f32
    %39 = vector.broadcast %cst_19 : f32 to vector<4x16x1xf32>
    %40 = arith.addf %38, %39 : vector<4x16x1xf32>
    %41 = math.rsqrt %40 : vector<4x16x1xf32>
    %42 = vector.broadcast %41 : vector<4x16x1xf32> to vector<4x16x16xf32>
    %43 = arith.mulf %33, %42 : vector<4x16x16xf32>
    %c0_20 = arith.constant 0 : index
    %c0_21 = arith.constant 0 : index
    %44 = vector.load %arg5[%c0_20, %c0_21] : memref<16x64xf32, #tpu.memory_space<vmem>>, vector<16x64xf32>
    "tpu.trace_start"() <{level = 10 : i32, message = "bhw,wf->bhf"}> : () -> ()
    %cst_22 = arith.constant dense<0.000000e+00> : vector<4x16x64xf32>
    %45 = tpu.matmul %43, %44, %cst_22 {dimension_numbers = #tpu.dot_dimension_numbers<[2], [0], [0, 1], [1], [0, 0, 0, 1, 1, 1], [], []>} : vector<4x16x16xf32>, vector<16x64xf32>, vector<4x16x64xf32> -> vector<4x16x64xf32>
    "tpu.trace_stop"() : () -> ()
    %c0_23 = arith.constant 0 : index
    %c0_24 = arith.constant 0 : index
    %c0_25 = arith.constant 0 : index
    %46 = vector.load %arg6[%c0_23, %c0_24, %c0_25] : memref<1x1x64xf32, #tpu.memory_space<vmem>>, vector<1x1x64xf32>
    %47 = vector.broadcast %46 : vector<1x1x64xf32> to vector<4x16x64xf32>
    %48 = arith.addf %45, %47 : vector<4x16x64xf32>
    %cst_26 = arith.constant 5.000000e-01 : f32
    %49 = vector.broadcast %cst_26 : f32 to vector<4x16x64xf32>
    %50 = arith.mulf %49, %48 : vector<4x16x64xf32>
    %cst_27 = arith.constant 4.471500e-02 : f32
    %51 = vector.broadcast %cst_27 : f32 to vector<4x16x64xf32>
    %52 = arith.mulf %51, %48 : vector<4x16x64xf32>
    %53 = arith.mulf %52, %48 : vector<4x16x64xf32>
    %54 = arith.mulf %53, %48 : vector<4x16x64xf32>
    %55 = arith.addf %48, %54 : vector<4x16x64xf32>
    %cst_28 = arith.constant 0.797884583 : f32
    %56 = vector.broadcast %cst_28 : f32 to vector<4x16x64xf32>
    %57 = arith.mulf %56, %55 : vector<4x16x64xf32>
    %58 = math.tanh %57 : vector<4x16x64xf32>
    %cst_29 = arith.constant 1.000000e+00 : f32
    %59 = vector.broadcast %cst_29 : f32 to vector<4x16x64xf32>
    %60 = arith.addf %59, %58 : vector<4x16x64xf32>
    %61 = arith.mulf %50, %60 : vector<4x16x64xf32>
    %c0_30 = arith.constant 0 : index
    %c0_31 = arith.constant 0 : index
    %62 = vector.load %arg7[%c0_30, %c0_31] : memref<64x16xf32, #tpu.memory_space<vmem>>, vector<64x16xf32>
    "tpu.trace_start"() <{level = 10 : i32, message = "bhf,fw->bhw"}> : () -> ()
    %cst_32 = arith.constant dense<0.000000e+00> : vector<4x16x16xf32>
    %63 = tpu.matmul %61, %62, %cst_32 {dimension_numbers = #tpu.dot_dimension_numbers<[2], [0], [0, 1], [1], [0, 0, 0, 1, 1, 1], [], []>} : vector<4x16x64xf32>, vector<64x16xf32>, vector<4x16x16xf32> -> vector<4x16x16xf32>
    "tpu.trace_stop"() : () -> ()
    %64 = arith.addf %27, %63 : vector<4x16x16xf32>
    %c0_33 = arith.constant 0 : index
    %c0_34 = arith.constant 0 : index
    %c0_35 = arith.constant 0 : index
    %65 = vector.load %arg8[%c0_33, %c0_34, %c0_35] : memref<1x1x16xf32, #tpu.memory_space<vmem>>, vector<1x1x16xf32>
    %66 = vector.broadcast %65 : vector<1x1x16xf32> to vector<4x16x16xf32>
    %67 = arith.addf %64, %66 : vector<4x16x16xf32>
    %c0_36 = arith.constant 0 : index
    %c0_37 = arith.constant 0 : index
    %c0_38 = arith.constant 0 : index
    %68 = vector.load %arg9[%c0_36, %c0_37, %c0_38] : memref<4x16x16xf32, #tpu.memory_space<vmem>>, vector<4x16x16xf32>
    tpu.vector_store %arg9[%c0_36, %c0_37, %c0_38], %67 {strides = array<i32>} : memref<4x16x16xf32, #tpu.memory_space<vmem>>, vector<4x16x16xf32>,
    return
  }
  func.func @transform_0(%arg0: i32) -> (i32, i32, i32) {
    %c0_i32 = arith.constant 0 : i32
    %c0_i32_0 = arith.constant 0 : i32
    %c0_i32_1 = arith.constant 0 : i32
    return %arg0, %c0_i32, %c0_i32_0 : i32, i32, i32
  }
  func.func @transform_1(%arg0: i32) -> (i32, i32) {
    %c0_i32 = arith.constant 0 : i32
    %c0_i32_0 = arith.constant 0 : i32
    %c0_i32_1 = arith.constant 0 : i32
    return %c0_i32, %c0_i32_0 : i32, i32
  }
  func.func @transform_2(%arg0: i32) -> (i32, i32) {
    %c0_i32 = arith.constant 0 : i32
    %c0_i32_0 = arith.constant 0 : i32
    %c0_i32_1 = arith.constant 0 : i32
    return %c0_i32, %c0_i32_0 : i32, i32
  }
  func.func @transform_3(%arg0: i32) -> (i32, i32, i32) {
    %c0_i32 = arith.constant 0 : i32
    %c0_i32_0 = arith.constant 0 : i32
    %c0_i32_1 = arith.constant 0 : i32
    %c0_i32_2 = arith.constant 0 : i32
    return %c0_i32, %c0_i32_0, %c0_i32_1 : i32, i32, i32
  }
  func.func @transform_4(%arg0: i32) -> (i32, i32) {
    %c0_i32 = arith.constant 0 : i32
    %c0_i32_0 = arith.constant 0 : i32
    %c0_i32_1 = arith.constant 0 : i32
    return %c0_i32, %c0_i32_0 : i32, i32
  }
  func.func @transform_5(%arg0: i32) -> (i32, i32, i32) {
    %c0_i32 = arith.constant 0 : i32
    %c0_i32_0 = arith.constant 0 : i32
    %c0_i32_1 = arith.constant 0 : i32
    %c0_i32_2 = arith.constant 0 : i32
    return %c0_i32, %c0_i32_0, %c0_i32_1 : i32, i32, i32
  }
  func.func @transform_6(%arg0: i32) -> (i32, i32) {
    %c0_i32 = arith.constant 0 : i32
    %c0_i32_0 = arith.constant 0 : i32
    %c0_i32_1 = arith.constant 0 : i32
    return %c0_i32, %c0_i32_0 : i32, i32
  }
  func.func @transform_7(%arg0: i32) -> (i32, i32, i32) {
    %c0_i32 = arith.constant 0 : i32
    %c0_i32_0 = arith.constant 0 : i32
    %c0_i32_1 = arith.constant 0 : i32
    %c0_i32_2 = arith.constant 0 : i32
    return %c0_i32, %c0_i32_0, %c0_i32_1 : i32, i32, i32
  }
  func.func @transform_8(%arg0: i32) -> (i32, i32, i32) {
    %c0_i32 = arith.constant 0 : i32
    %c0_i32_0 = arith.constant 0 : i32
    %c0_i32_1 = arith.constant 0 : i32
    return %arg0, %c0_i32, %c0_i32_0 : i32, i32, i32
  }
}

</mosaic_0001>

<llo_original>
// kernel: tpu_custom_call.1
$region0: #{tpu_custom_call.1}
  #allocation0 [shape = 'u32[]', space=smem, size = 0x4, offset = 0x4, fixed_abs, tag = 'smem constant byte address 0x4 - core index']
  #allocation1 [shape = 'u32[144,128]{1,0:T(1,128)}', space=vmem, size = 0x12000, scoped, tag = 'internal scratch']
  %s0 = inlined_call_operand.hbm [shape: f32[8,16,16], index: 0, kind: input, shape index: {}]
  %s1 = inlined_call_operand.vmem [shape: f32[16,16], index: 1, kind: input, shape index: {}]
  %s2 = inlined_call_operand.vmem [shape: f32[16,16], index: 2, kind: input, shape index: {}]
  %s3 = inlined_call_operand.vmem [shape: f32[1,16,16], index: 3, kind: input, shape index: {}]
  %s4 = inlined_call_operand.vmem [shape: f32[16,64], index: 4, kind: input, shape index: {}]
  %s5 = inlined_call_operand.vmem [shape: f32[1,1,64], index: 5, kind: input, shape index: {}]
  %s6 = inlined_call_operand.vmem [shape: f32[64,16], index: 6, kind: input, shape index: {}]
  %s7 = inlined_call_operand.vmem [shape: f32[1,1,16], index: 7, kind: input, shape index: {}]
  %s8 = inlined_call_operand.hbm [shape: f32[8,16,16], index: 8, kind: output, shape index: {}]
  %s9 = sld [smem:[#allocation0]]
  $region69: #{tpu_custom_call.1} parent=0
    _
  %s11 = ssub.s32 1, %s9
  %s12 = scalar_select 0, %s11, %s9
  $region1: #{tpu_custom_call.1} parent=0
    #allocation2 [shape = 'u8[65536]{0}', space=vmem, size = 0x10000, scoped, tag = 'input window, operand 0']
    #allocation3 [shape = 's32[2]{0}', space=sflag, size = 0x8, scoped, tag = 'scoped memory for tpu_custom_call.1']
    #allocation4 [shape = 's32[2]{0}', space=sflag, size = 0x8, scoped, tag = 'scoped memory for tpu_custom_call.1']
    #allocation5 [shape = 'u8[65536]{0}', space=vmem, size = 0x10000, scoped, tag = 'output window, operand 0']
    %13 = vsyncpa [#allocation3], 0
    %s14 = scalar_lea.sflag [#allocation3], 1
    %15 = vsyncpa %s14, 0
    %16 = vsyncpa [#allocation4], 0
    %s17 = scalar_lea.sflag [#allocation4], 1
    %18 = vsyncpa %s17, 0
    loop: start=0, step=1, limit=4
    $region2: #{tpu_custom_call.1} parent=1 // loop_pre_header
      _
    $region3: #{tpu_custom_call.1} parent=1 // loop_header
      %s20 = sphi 0, %s24
      %p21 = scmp.ge.s32.totalorder %s20, 4
      %s30 = sphi 0, %s32
      %s33 = sphi 0, %s30
      %s34 = sphi 0, %s33
      %s50 = sphi 0, %s34
      %s54 = sphi 0, %s54
      %s56 = sphi 0, %s54
      %s57 = sphi 0, %s56
      %s71 = sphi 0, %s57
      %s75 = sphi 0, %s75
      %s77 = sphi 0, %s75
      %s78 = sphi 0, %s77
      %s92 = sphi 0, %s78
      %s96 = sphi 0, %s96
      %s98 = sphi 0, %s96
      %s99 = sphi 0, %s98
      %s113 = sphi 0, %s99
      %s117 = sphi 0, %s117
      %s119 = sphi 0, %s117
      %s120 = sphi 0, %s119
      %s134 = sphi 0, %s120
      %s138 = sphi 0, %s138
      %s140 = sphi 0, %s138
      %s141 = sphi 0, %s140
      %s155 = sphi 0, %s141
      %s159 = sphi 0, %s159
      %s161 = sphi 0, %s159
      %s162 = sphi 0, %s161
      %s176 = sphi 0, %s162
      %s180 = sphi 0, %s180
      %s182 = sphi 0, %s180
      %s183 = sphi 0, %s182
      %s197 = sphi 0, %s183
      %s203 = sphi 0, %s205
      %s206 = sphi 0, %s203
      %s207 = sphi 0, %s206
      %s223 = sphi 0, %s207
    $region4: #{tpu_custom_call.1} parent=1 // loop_header_branch
      %23 = sbr.rel (%p21) target = $region8
    $region5: #{tpu_custom_call.1} parent=1 // loop_body
      %s25 = ssub.s32 %s20, 1
      %s26 = ssub.s32 %s20, 2
      %s27 = sadd.s32 %s20, 1
      %s28 = ssub.s32 %s20, %s27
      %p29 = scmp.eq.s32.totalorder %s28, 0
      %s31 = sadd.s32 %s30, 1
      %s32 = scalar_select %p29, %s30, %s31
      %p35 = pneg %p29
      %p36 = scmp.eq.s32.totalorder %s20, 1
      %p37 = por %p35, %p36
      %p38 = scmp.ne.s32.totalorder %s30, %s33
      %p39 = scmp.eq.s32.totalorder %s20, 0
      %p40 = por %p38, %p39
      %p41 = scmp.ne.s32.totalorder %s30, %s33
      %p42 = scmp.eq.s32.totalorder %s25, 1
      %p43 = por %p41, %p42
      %p44 = scmp.ne.s32.totalorder %s33, %s34
      %p45 = scmp.eq.s32.totalorder %s25, 0
      %p46 = por %p44, %p45
      %p47 = scmp.ne.s32.totalorder %s33, %s34
      %p48 = scmp.eq.s32.totalorder %s26, 1
      %p49 = por %p47, %p48
      %p51 = scmp.ne.s32.totalorder %s34, %s50
      %p52 = scmp.eq.s32.totalorder %s26, 0
      %p53 = por %p51, %p52
      %s55 = sadd.s32 %s54, 1
      %p58 = scmp.eq.s32.totalorder %s20, 1
      %p59 = scmp.ne.s32.totalorder %s54, %s56
      %p60 = scmp.eq.s32.totalorder %s20, 0
      %p61 = por %p59, %p60
      %p62 = scmp.ne.s32.totalorder %s54, %s56
      %p63 = scmp.eq.s32.totalorder %s25, 1
      %p64 = por %p62, %p63
      %p65 = scmp.ne.s32.totalorder %s56, %s57
      %p66 = scmp.eq.s32.totalorder %s25, 0
      %p67 = por %p65, %p66
      %p68 = scmp.ne.s32.totalorder %s56, %s57
      %p69 = scmp.eq.s32.totalorder %s26, 1
      %p70 = por %p68, %p69
      %p72 = scmp.ne.s32.totalorder %s57, %s71
      %p73 = scmp.eq.s32.totalorder %s26, 0
      %p74 = por %p72, %p73
      %s76 = sadd.s32 %s75, 1
      %p79 = scmp.eq.s32.totalorder %s20, 1
      %p80 = scmp.ne.s32.totalorder %s75, %s77
      %p81 = scmp.eq.s32.totalorder %s20, 0
      %p82 = por %p80, %p81
      %p83 = scmp.ne.s32.totalorder %s75, %s77
      %p84 = scmp.eq.s32.totalorder %s25, 1
      %p85 = por %p83, %p84
      %p86 = scmp.ne.s32.totalorder %s77, %s78
      %p87 = scmp.eq.s32.totalorder %s25, 0
      %p88 = por %p86, %p87
      %p89 = scmp.ne.s32.totalorder %s77, %s78
      %p90 = scmp.eq.s32.totalorder %s26, 1
      %p91 = por %p89, %p90
      %p93 = scmp.ne.s32.totalorder %s78, %s92
      %p94 = scmp.eq.s32.totalorder %s26, 0
      %p95 = por %p93, %p94
      %s97 = sadd.s32 %s96, 1
      %p100 = scmp.eq.s32.totalorder %s20, 1
      %p101 = scmp.ne.s32.totalorder %s96, %s98
      %p102 = scmp.eq.s32.totalorder %s20, 0
      %p103 = por %p101, %p102
      %p104 = scmp.ne.s32.totalorder %s96, %s98
      %p105 = scmp.eq.s32.totalorder %s25, 1
      %p106 = por %p104, %p105
      %p107 = scmp.ne.s32.totalorder %s98, %s99
      %p108 = scmp.eq.s32.totalorder %s25, 0
      %p109 = por %p107, %p108
      %p110 = scmp.ne.s32.totalorder %s98, %s99
      %p111 = scmp.eq.s32.totalorder %s26, 1
      %p112 = por %p110, %p111
      %p114 = scmp.ne.s32.totalorder %s99, %s113
      %p115 = scmp.eq.s32.totalorder %s26, 0
      %p116 = por %p114, %p115
      %s118 = sadd.s32 %s117, 1
      %p121 = scmp.eq.s32.totalorder %s20, 1
      %p122 = scmp.ne.s32.totalorder %s117, %s119
      %p123 = scmp.eq.s32.totalorder %s20, 0
      %p124 = por %p122, %p123
      %p125 = scmp.ne.s32.totalorder %s117, %s119
      %p126 = scmp.eq.s32.totalorder %s25, 1
      %p127 = por %p125, %p126
      %p128 = scmp.ne.s32.totalorder %s119, %s120
      %p129 = scmp.eq.s32.totalorder %s25, 0
      %p130 = por %p128, %p129
      %p131 = scmp.ne.s32.totalorder %s119, %s120
      %p132 = scmp.eq.s32.totalorder %s26, 1
      %p133 = por %p131, %p132
      %p135 = scmp.ne.s32.totalorder %s120, %s134
      %p136 = scmp.eq.s32.totalorder %s26, 0
      %p137 = por %p135, %p136
      %s139 = sadd.s32 %s138, 1
      %p142 = scmp.eq.s32.totalorder %s20, 1
      %p143 = scmp.ne.s32.totalorder %s138, %s140
      %p144 = scmp.eq.s32.totalorder %s20, 0
      %p145 = por %p143, %p144
      %p146 = scmp.ne.s32.totalorder %s138, %s140
      %p147 = scmp.eq.s32.totalorder %s25, 1
      %p148 = por %p146, %p147
      %p149 = scmp.ne.s32.totalorder %s140, %s141
      %p150 = scmp.eq.s32.totalorder %s25, 0
      %p151 = por %p149, %p150
      %p152 = scmp.ne.s32.totalorder %s140, %s141
      %p153 = scmp.eq.s32.totalorder %s26, 1
      %p154 = por %p152, %p153
      %p156 = scmp.ne.s32.totalorder %s141, %s155
      %p157 = scmp.eq.s32.totalorder %s26, 0
      %p158 = por %p156, %p157
      %s160 = sadd.s32 %s159, 1
      %p163 = scmp.eq.s32.totalorder %s20, 1
      %p164 = scmp.ne.s32.totalorder %s159, %s161
      %p165 = scmp.eq.s32.totalorder %s20, 0
      %p166 = por %p164, %p165
      %p167 = scmp.ne.s32.totalorder %s159, %s161
      %p168 = scmp.eq.s32.totalorder %s25, 1
      %p169 = por %p167, %p168
      %p170 = scmp.ne.s32.totalorder %s161, %s162
      %p171 = scmp.eq.s32.totalorder %s25, 0
      %p172 = por %p170, %p171
      %p173 = scmp.ne.s32.totalorder %s161, %s162
      %p174 = scmp.eq.s32.totalorder %s26, 1
      %p175 = por %p173, %p174
      %p177 = scmp.ne.s32.totalorder %s162, %s176
      %p178 = scmp.eq.s32.totalorder %s26, 0
      %p179 = por %p177, %p178
      %s181 = sadd.s32 %s180, 1
      %p184 = scmp.eq.s32.totalorder %s20, 1
      %p185 = scmp.ne.s32.totalorder %s180, %s182
      %p186 = scmp.eq.s32.totalorder %s20, 0
      %p187 = por %p185, %p186
      %p188 = scmp.ne.s32.totalorder %s180, %s182
      %p189 = scmp.eq.s32.totalorder %s25, 1
      %p190 = por %p188, %p189
      %p191 = scmp.ne.s32.totalorder %s182, %s183
      %p192 = scmp.eq.s32.totalorder %s25, 0
      %p193 = por %p191, %p192
      %p194 = scmp.ne.s32.totalorder %s182, %s183
      %p195 = scmp.eq.s32.totalorder %s26, 1
      %p196 = por %p194, %p195
      %p198 = scmp.ne.s32.totalorder %s183, %s197
      %p199 = scmp.eq.s32.totalorder %s26, 0
      %p200 = por %p198, %p199
      %s201 = ssub.s32 %s20, %s27
      %p202 = scmp.eq.s32.totalorder %s201, 0
      %s204 = sadd.s32 %s203, 1
      %s205 = scalar_select %p202, %s203, %s204
      %p208 = pneg %p202
      %p209 = scmp.eq.s32.totalorder %s20, 1
      %p210 = por %p208, %p209
      %p211 = scmp.ne.s32.totalorder %s203, %s206
      %p212 = scmp.eq.s32.totalorder %s20, 0
      %p213 = por %p211, %p212
      %p214 = scmp.ne.s32.totalorder %s203, %s206
      %p215 = scmp.eq.s32.totalorder %s25, 1
      %p216 = por %p214, %p215
      %p217 = scmp.ne.s32.totalorder %s206, %s207
      %p218 = scmp.eq.s32.totalorder %s25, 0
      %p219 = por %p217, %p218
      %p220 = scmp.ne.s32.totalorder %s206, %s207
      %p221 = scmp.eq.s32.totalorder %s26, 1
      %p222 = por %p220, %p221
      %p224 = scmp.ne.s32.totalorder %s207, %s223
      %p225 = scmp.eq.s32.totalorder %s26, 0
      %p226 = por %p224, %p225
      %p227 = scmp.le.s32.totalorder 1, %s20
      %p228 = scmp.lt.s32.totalorder %s20, 3
      %p229 = pnand %p227, %p228
      %p230 = pneg %p229
      // Predicated region
      $region9: #{tpu_custom_call.1} parent=5 // pred_check
        _
      $region10: #{tpu_custom_call.1} parent=5 // pred_check_branch
        %232 = sbr.rel (%p229) target = $region12
      $region11: #{tpu_custom_call.1} parent=5 // pred_region
        %s233 = ssub.s32 %s20, 1
        // Predicated region
        $region13: #{tpu_custom_call.1} parent=11 // pred_check
          %p234 = pneg %p67
        $region14: #{tpu_custom_call.1} parent=11 // pred_check_branch
          %236 = sbr.rel (%p234) target = $region16
        $region15: #{tpu_custom_call.1} parent=11 // pred_region
          _
        $region16: #{tpu_custom_call.1} parent=11 // pred_fallthru
          _
        // Predicated region
        $region17: #{tpu_custom_call.1} parent=11 // pred_check
          %p237 = pneg %p88
        $region18: #{tpu_custom_call.1} parent=11 // pred_check_branch
          %239 = sbr.rel (%p237) target = $region20
        $region19: #{tpu_custom_call.1} parent=11 // pred_region
          _
        $region20: #{tpu_custom_call.1} parent=11 // pred_fallthru
          _
        // Predicated region
        $region21: #{tpu_custom_call.1} parent=11 // pred_check
          %p240 = pneg %p109
        $region22: #{tpu_custom_call.1} parent=11 // pred_check_branch
          %242 = sbr.rel (%p240) target = $region24
        $region23: #{tpu_custom_call.1} parent=11 // pred_region
          _
        $region24: #{tpu_custom_call.1} parent=11 // pred_fallthru
          _
        // Predicated region
        $region25: #{tpu_custom_call.1} parent=11 // pred_check
          %p243 = pneg %p130
        $region26: #{tpu_custom_call.1} parent=11 // pred_check_branch
          %245 = sbr.rel (%p243) target = $region28
        $region27: #{tpu_custom_call.1} parent=11 // pred_region
          _
        $region28: #{tpu_custom_call.1} parent=11 // pred_fallthru
          _
        // Predicated region
        $region29: #{tpu_custom_call.1} parent=11 // pred_check
          %p246 = pneg %p151
        $region30: #{tpu_custom_call.1} parent=11 // pred_check_branch
          %248 = sbr.rel (%p246) target = $region32
        $region31: #{tpu_custom_call.1} parent=11 // pred_region
          _
        $region32: #{tpu_custom_call.1} parent=11 // pred_fallthru
          _
        // Predicated region
        $region33: #{tpu_custom_call.1} parent=11 // pred_check
          %p249 = pneg %p172
        $region34: #{tpu_custom_call.1} parent=11 // pred_check_branch
          %251 = sbr.rel (%p249) target = $region36
        $region35: #{tpu_custom_call.1} parent=11 // pred_region
          _
        $region36: #{tpu_custom_call.1} parent=11 // pred_fallthru
          _
        // Predicated region
        $region37: #{tpu_custom_call.1} parent=11 // pred_check
          %p252 = pneg %p193
        $region38: #{tpu_custom_call.1} parent=11 // pred_check_branch
          %254 = sbr.rel (%p252) target = $region40
        $region39: #{tpu_custom_call.1} parent=11 // pred_region
          _
        $region40: #{tpu_custom_call.1} parent=11 // pred_fallthru
          _
      $region12: #{tpu_custom_call.1} parent=5 // pred_fallthru
        _
      %p255 = scmp.lt.s32.totalorder %s20, 2
      // Predicated region
      $region41: #{tpu_custom_call.1} parent=5 // pred_check
        %p256 = pneg %p255
      $region42: #{tpu_custom_call.1} parent=5 // pred_check_branch
        %258 = sbr.rel (%p256) target = $region44
      $region43: #{tpu_custom_call.1} parent=5 // pred_region
        // Predicated region
        $region45: #{tpu_custom_call.1} parent=43 // pred_check
          %p259 = pneg %p40
        $region46: #{tpu_custom_call.1} parent=43 // pred_check_branch
          %261 = sbr.rel (%p259) target = $region48
        $region47: #{tpu_custom_call.1} parent=43 // pred_region
          %s262 = sand.u32 %s30, 1
          %s263 = scalar_lea.sflag [#allocation3], %s262
          %s264 = sand.u32 %s30, 1
          %s265 = smul.addr %s264, 64
          %s266 = scalar_lea.vmem [#allocation2], %s265
          %s267 = smul.u32 4, %s20
          %s269 = ssub.s32 1024, 1024
          %270 = vsyncadd %s263, %s269
          %s271 = smul.addr %s267, 2
          %s272 = smul.addr %s271, 128
          %s273 = scalar_lea.hbm %s0, %s272
          %s274 = sshll.u32 %s266, 4
          %s275 = int_to_ptr.vmem [resolvable:$true] %s274
          %280 = dma.hbm_to_vmem [thread:$0]  %s273, 1024, %s275, %s263, 128, 128, 8
        $region48: #{tpu_custom_call.1} parent=43 // pred_fallthru
          _
      $region44: #{tpu_custom_call.1} parent=5 // pred_fallthru
        _
      %p281 = scmp.le.s32.totalorder 1, %s20
      %p282 = scmp.lt.s32.totalorder %s20, 3
      %p283 = pnand %p281, %p282
      %p284 = pneg %p283
      // Predicated region
      $region49: #{tpu_custom_call.1} parent=5 // pred_check
        _
      $region50: #{tpu_custom_call.1} parent=5 // pred_check_branch
        %286 = sbr.rel (%p283) target = $region52
      $region51: #{tpu_custom_call.1} parent=5 // pred_region
        %s287 = ssub.s32 %s20, 1
        %s288 = sand.u32 %s33, 1
        %s289 = scalar_lea.sflag [#allocation3], %s288
        %s290 = sand.u32 %s33, 1
        %s291 = smul.addr %s290, 64
        %s292 = scalar_lea.vmem [#allocation2], %s291
        // Predicated region
        $region53: #{tpu_custom_call.1} parent=51 // pred_check
          %p293 = pneg %p46
        $region54: #{tpu_custom_call.1} parent=51 // pred_check_branch
          %295 = sbr.rel (%p293) target = $region56
        $region55: #{tpu_custom_call.1} parent=51 // pred_region
          %296 = dma.done %s289, 1024
        $region56: #{tpu_custom_call.1} parent=51 // pred_fallthru
          _
        %s297 = sand.u32 %s33, 1
        %s298 = scalar_lea.sflag [#allocation3], %s297
        %s299 = sand.u32 %s33, 1
        %s300 = smul.addr %s299, 64
        %s301 = scalar_lea.vmem [#allocation2], %s300
        %p302 = pneg %p46
        %p303 = pneg %p43
        %p304 = pneg %p67
        %p305 = pneg %p64
        %p306 = pneg %p88
        %p307 = pneg %p85
        %p308 = pneg %p109
        %p309 = pneg %p106
        %p310 = pneg %p130
        %p311 = pneg %p127
        %p312 = pneg %p151
        %p313 = pneg %p148
        %p314 = pneg %p172
        %p315 = pneg %p169
        %p316 = pneg %p193
        %p317 = pneg %p190
        %p318 = pneg %p219
        %p319 = pneg %p216
        %s320 = sand.u32 %s206, 1
        %s321 = scalar_lea.sflag [#allocation4], %s320
        %s322 = sand.u32 %s206, 1
        %s323 = smul.addr %s322, 64
        %s324 = scalar_lea.vmem [#allocation5], %s323
        %s325 = smul.u32 4, %s25
        %s326 = smul.u32 4, %s25
        %v327 = vld [vmem:[%s292] sm:$0xff]
        %v328 = vld [vmem:[%s292 + $0x8] sm:$0xff]
        %v329 = vld [vmem:[%s292 + $0x10] sm:$0xff]
        %v330 = vld [vmem:[%s292 + $0x18] sm:$0xff]
        %v331 = vld [vmem:[%s292 + $0x20] sm:$0xff]
        %v332 = vld [vmem:[%s292 + $0x28] sm:$0xff]
        %v333 = vld [vmem:[%s292 + $0x30] sm:$0xff]
        %v334 = vld [vmem:[%s292 + $0x38] sm:$0xff]
        %vm335 = vcmask 130048
        %v336 = vsel %vm335, %v327, 0.0
        %337 = vadd.xlane.f32.xlu0 %v336
        %v338 = vpop.xlane.xlu0 %337
        %v339 = vsel %vm335, %v328, 0.0
        %340 = vadd.xlane.f32.xlu0 %v339
        %v341 = vpop.xlane.xlu0 %340
        %v342 = vsel %vm335, %v329, 0.0
        %343 = vadd.xlane.f32.xlu0 %v342
        %v344 = vpop.xlane.xlu0 %343
        %v345 = vsel %vm335, %v330, 0.0
        %346 = vadd.xlane.f32.xlu0 %v345
        %v347 = vpop.xlane.xlu0 %346
        %v348 = vsel %vm335, %v331, 0.0
        %349 = vadd.xlane.f32.xlu0 %v348
        %v350 = vpop.xlane.xlu0 %349
        %v351 = vsel %vm335, %v332, 0.0
        %352 = vadd.xlane.f32.xlu0 %v351
        %v353 = vpop.xlane.xlu0 %352
        %v354 = vsel %vm335, %v333, 0.0
        %355 = vadd.xlane.f32.xlu0 %v354
        %v356 = vpop.xlane.xlu0 %355
        %v357 = vsel %vm335, %v334, 0.0
        %358 = vadd.xlane.f32.xlu0 %v357
        %v359 = vpop.xlane.xlu0 %358
        %v360 = vrcp.pop 16.0
        %v361 = vmul.f32 %v338, %v360
        %v362 = vmul.f32 %v341, %v360
        %v363 = vmul.f32 %v344, %v360
        %v364 = vmul.f32 %v347, %v360
        %v365 = vmul.f32 %v350, %v360
        %v366 = vmul.f32 %v353, %v360
        %v367 = vmul.f32 %v356, %v360
        %v368 = vmul.f32 %v359, %v360
        %v369 = vsub.f32 %v327, %v361
        %v370 = vsub.f32 %v328, %v362
        %v371 = vsub.f32 %v329, %v363
        %v372 = vsub.f32 %v330, %v364
        %v373 = vsub.f32 %v331, %v365
        %v374 = vsub.f32 %v332, %v366
        %v375 = vsub.f32 %v333, %v367
        %v376 = vsub.f32 %v334, %v368
        %v377 = vmul.f32 %v369, %v369
        %v378 = vmul.f32 %v370, %v370
        %v379 = vmul.f32 %v371, %v371
        %v380 = vmul.f32 %v372, %v372
        %v381 = vmul.f32 %v373, %v373
        %v382 = vmul.f32 %v374, %v374
        %v383 = vmul.f32 %v375, %v375
        %v384 = vmul.f32 %v376, %v376
        %v385 = vsel %vm335, %v377, 0.0
        %386 = vadd.xlane.f32.xlu0 %v385
        %v387 = vpop.xlane.xlu0 %386
        %v388 = vsel %vm335, %v378, 0.0
        %389 = vadd.xlane.f32.xlu0 %v388
        %v390 = vpop.xlane.xlu0 %389
        %v391 = vsel %vm335, %v379, 0.0
        %392 = vadd.xlane.f32.xlu0 %v391
        %v393 = vpop.xlane.xlu0 %392
        %v394 = vsel %vm335, %v380, 0.0
        %395 = vadd.xlane.f32.xlu0 %v394
        %v396 = vpop.xlane.xlu0 %395
        %v397 = vsel %vm335, %v381, 0.0
        %398 = vadd.xlane.f32.xlu0 %v397
        %v399 = vpop.xlane.xlu0 %398
        %v400 = vsel %vm335, %v382, 0.0
        %401 = vadd.xlane.f32.xlu0 %v400
        %v402 = vpop.xlane.xlu0 %401
        %v403 = vsel %vm335, %v383, 0.0
        %404 = vadd.xlane.f32.xlu0 %v403
        %v405 = vpop.xlane.xlu0 %404
        %v406 = vsel %vm335, %v384, 0.0
        %407 = vadd.xlane.f32.xlu0 %v406
        %v408 = vpop.xlane.xlu0 %407
        %v409 = vmul.f32 %v387, %v360
        %v410 = vmul.f32 %v390, %v360
        %v411 = vmul.f32 %v393, %v360
        %v412 = vmul.f32 %v396, %v360
        %v413 = vmul.f32 %v399, %v360
        %v414 = vmul.f32 %v402, %v360
        %v415 = vmul.f32 %v405, %v360
        %v416 = vmul.f32 %v408, %v360
        %v417 = vadd.f32 %v409, 1e-05
        %v418 = vadd.f32 %v410, 1e-05
        %v419 = vadd.f32 %v411, 1e-05
        %v420 = vadd.f32 %v412, 1e-05
        %v421 = vadd.f32 %v413, 1e-05
        %v422 = vadd.f32 %v414, 1e-05
        %v423 = vadd.f32 %v415, 1e-05
        %v424 = vadd.f32 %v416, 1e-05
        %v425 = vrsqrt.pop %v417
        %v426 = vrsqrt.pop %v418
        %v427 = vrsqrt.pop %v419
        %v428 = vrsqrt.pop %v420
        %v429 = vrsqrt.pop %v421
        %v430 = vrsqrt.pop %v422
        %v431 = vrsqrt.pop %v423
        %v432 = vrsqrt.pop %v424
        %v433 = vmul.f32 %v369, %v425
        %v434 = vmul.f32 %v370, %v426
        %v435 = vmul.f32 %v371, %v427
        %v436 = vmul.f32 %v372, %v428
        %v437 = vmul.f32 %v373, %v429
        %v438 = vmul.f32 %v374, %v430
        %v439 = vmul.f32 %v375, %v431
        %v440 = vmul.f32 %v376, %v432
        %v441 = vld [vmem:[%s1] sm:$0xff]
        %v442 = vld [vmem:[%s1 + $0x8] sm:$0xff]
        %v444 = vsel %vm335, %v441, 0
        %v447 = vsel %vm335, %v442, 0
        %449 = vmatprep.subr.mxu0 0.0
        %450 = vmatpush1.msra.mxu0 0.0
        %451 = vmatprep.subr.mxu0 0.0
        %452 = vmatpush1.msra.mxu0 0.0
        %453 = vmatprep.subr.mxu0 0.0
        %454 = vmatpush1.msra.mxu0 0.0
        %455 = vmatprep.subr.mxu0 0.0
        %456 = vmatpush1.msra.mxu0 0.0
        %457 = vmatprep.subr.mxu0 0.0
        %458 = vmatpush1.msra.mxu0 0.0
        %459 = vmatprep.subr.mxu0 0.0
        %460 = vmatpush1.msra.mxu0 0.0
        %461 = vmatprep.subr.mxu0 0.0
        %462 = vmatpush1.msra.mxu0 0.0
        %463 = vmatprep.subr.mxu0 0.0
        %464 = vmatpush1.msra.mxu0 0.0
        %465 = vmatprep.subr.mxu0 0.0
        %466 = vmatpush1.msra.mxu0 0.0
        %467 = vmatprep.subr.mxu0 0.0
        %468 = vmatpush1.msra.mxu0 0.0
        %469 = vmatprep.subr.mxu0 0.0
        %470 = vmatpush1.msra.mxu0 0.0
        %471 = vmatprep.subr.mxu0 0.0
        %472 = vmatpush1.msra.mxu0 0.0
        %473 = vmatprep.subr.mxu0 0.0
        %474 = vmatpush1.msra.mxu0 0.0
        %475 = vmatprep.subr.mxu0 0.0
        %476 = vmatpush1.msra.mxu0 0.0
        %477 = vmatprep.subr.mxu0 0.0
        %478 = vmatpush1.msra.mxu0 %v434
        %479 = vmatprep.subr.mxu0 0.0
        %480 = vmatpush1.msra.mxu0 %v433
        %481 = vmatprep.subr.mxu0 0.0
        %482 = vmatpush2.msra.mxu0 0.0
        %483 = vmatprep.subr.mxu0 0.0
        %484 = vmatpush2.msra.mxu0 0.0
        %485 = vmatprep.subr.mxu0 0.0
        %486 = vmatpush2.msra.mxu0 0.0
        %487 = vmatprep.subr.mxu0 0.0
        %488 = vmatpush2.msra.mxu0 0.0
        %489 = vmatprep.subr.mxu0 0.0
        %490 = vmatpush2.msra.mxu0 0.0
        %491 = vmatprep.subr.mxu0 0.0
        %492 = vmatpush2.msra.mxu0 0.0
        %493 = vmatprep.subr.mxu0 0.0
        %494 = vmatpush2.msra.mxu0 0.0
        %495 = vmatprep.subr.mxu0 0.0
        %496 = vmatpush2.msra.mxu0 0.0
        %497 = vmatprep.subr.mxu0 0.0
        %498 = vmatpush2.msra.mxu0 0.0
        %499 = vmatprep.subr.mxu0 0.0
        %500 = vmatpush2.msra.mxu0 0.0
        %501 = vmatprep.subr.mxu0 0.0
        %502 = vmatpush2.msra.mxu0 0.0
        %503 = vmatprep.subr.mxu0 0.0
        %504 = vmatpush2.msra.mxu0 0.0
        %505 = vmatprep.subr.mxu0 0.0
        %506 = vmatpush2.msra.mxu0 0.0
        %507 = vmatprep.subr.mxu0 0.0
        %508 = vmatpush2.msra.mxu0 0.0
        %509 = vmatprep.subr.mxu0 0.0
        %510 = vmatpush2.msra.mxu0 0.0
        %511 = vmatprep.subr.mxu0 0.0
        %512 = vmatpush2.msra.mxu0 0.0
        %513 = vmatprep.mubr.f32.mxu0 0.0
        %514 = vmatmul.mubr.f32.gmra.mxu0 %v444
        %v515 = vpop.f32.mrf.mxu0
        %v516 = vadd.f32 0.0, %v515
        %v517 = vpop.f32.mrf.mxu0
        %518 = vmatprep.mubr.f32.mxu0 0.0
        %519 = vmatmul.mubr.f32.gmra.mxu0 %v447
        %v520 = vpop.f32.mrf.mxu0
        %v521 = vadd.f32 0.0, %v520
        %v522 = vpop.f32.mrf.mxu0
        %523 = vdwg.mxu0
        %524 = vmatprep.subr.mxu0 0.0
        %525 = vmatpush1.msra.mxu0 0.0
        %526 = vmatprep.subr.mxu0 0.0
        %527 = vmatpush1.msra.mxu0 0.0
        %528 = vmatprep.subr.mxu0 0.0
        %529 = vmatpush1.msra.mxu0 0.0
        %530 = vmatprep.subr.mxu0 0.0
        %531 = vmatpush1.msra.mxu0 0.0
        %532 = vmatprep.subr.mxu0 0.0
        %533 = vmatpush1.msra.mxu0 0.0
        %534 = vmatprep.subr.mxu0 0.0
        %535 = vmatpush1.msra.mxu0 0.0
        %536 = vmatprep.subr.mxu0 0.0
        %537 = vmatpush1.msra.mxu0 0.0
        %538 = vmatprep.subr.mxu0 0.0
        %539 = vmatpush1.msra.mxu0 0.0
        %540 = vmatprep.subr.mxu0 0.0
        %541 = vmatpush1.msra.mxu0 0.0
        %542 = vmatprep.subr.mxu0 0.0
        %543 = vmatpush1.msra.mxu0 0.0
        %544 = vmatprep.subr.mxu0 0.0
        %545 = vmatpush1.msra.mxu0 0.0
        %546 = vmatprep.subr.mxu0 0.0
        %547 = vmatpush1.msra.mxu0 0.0
        %548 = vmatprep.subr.mxu0 0.0
        %549 = vmatpush1.msra.mxu0 0.0
        %550 = vmatprep.subr.mxu0 0.0
        %551 = vmatpush1.msra.mxu0 0.0
        %552 = vmatprep.subr.mxu0 0.0
        %553 = vmatpush1.msra.mxu0 %v436
        %554 = vmatprep.subr.mxu0 0.0
        %555 = vmatpush1.msra.mxu0 %v435
        %556 = vmatprep.subr.mxu0 0.0
        %557 = vmatpush2.msra.mxu0 0.0
        %558 = vmatprep.subr.mxu0 0.0
        %559 = vmatpush2.msra.mxu0 0.0
        %560 = vmatprep.subr.mxu0 0.0
        %561 = vmatpush2.msra.mxu0 0.0
        %562 = vmatprep.subr.mxu0 0.0
        %563 = vmatpush2.msra.mxu0 0.0
        %564 = vmatprep.subr.mxu0 0.0
        %565 = vmatpush2.msra.mxu0 0.0
        %566 = vmatprep.subr.mxu0 0.0
        %567 = vmatpush2.msra.mxu0 0.0
        %568 = vmatprep.subr.mxu0 0.0
        %569 = vmatpush2.msra.mxu0 0.0
        %570 = vmatprep.subr.mxu0 0.0
        %571 = vmatpush2.msra.mxu0 0.0
        %572 = vmatprep.subr.mxu0 0.0
        %573 = vmatpush2.msra.mxu0 0.0
        %574 = vmatprep.subr.mxu0 0.0
        %575 = vmatpush2.msra.mxu0 0.0
        %576 = vmatprep.subr.mxu0 0.0
        %577 = vmatpush2.msra.mxu0 0.0
        %578 = vmatprep.subr.mxu0 0.0
        %579 = vmatpush2.msra.mxu0 0.0
        %580 = vmatprep.subr.mxu0 0.0
        %581 = vmatpush2.msra.mxu0 0.0
        %582 = vmatprep.subr.mxu0 0.0
        %583 = vmatpush2.msra.mxu0 0.0
        %584 = vmatprep.subr.mxu0 0.0
        %585 = vmatpush2.msra.mxu0 0.0
        %586 = vmatprep.subr.mxu0 0.0
        %587 = vmatpush2.msra.mxu0 0.0
        %588 = vmatprep.mubr.f32.mxu0 0.0
        %589 = vmatmul.mubr.f32.gmra.mxu0 %v444
        %v590 = vpop.f32.mrf.mxu0
        %v591 = vadd.f32 0.0, %v590
        %v592 = vpop.f32.mrf.mxu0
        %593 = vmatprep.mubr.f32.mxu0 0.0
        %594 = vmatmul.mubr.f32.gmra.mxu0 %v447
        %v595 = vpop.f32.mrf.mxu0
        %v596 = vadd.f32 0.0, %v595
        %v597 = vpop.f32.mrf.mxu0
        %598 = vdwg.mxu0
        %599 = vmatprep.subr.mxu0 0.0
        %600 = vmatpush1.msra.mxu0 0.0
        %601 = vmatprep.subr.mxu0 0.0
        %602 = vmatpush1.msra.mxu0 0.0
        %603 = vmatprep.subr.mxu0 0.0
        %604 = vmatpush1.msra.mxu0 0.0
        %605 = vmatprep.subr.mxu0 0.0
        %606 = vmatpush1.msra.mxu0 0.0
        %607 = vmatprep.subr.mxu0 0.0
        %608 = vmatpush1.msra.mxu0 0.0
        %609 = vmatprep.subr.mxu0 0.0
        %610 = vmatpush1.msra.mxu0 0.0
        %611 = vmatprep.subr.mxu0 0.0
        %612 = vmatpush1.msra.mxu0 0.0
        %613 = vmatprep.subr.mxu0 0.0
        %614 = vmatpush1.msra.mxu0 0.0
        %615 = vmatprep.subr.mxu0 0.0
        %616 = vmatpush1.msra.mxu0 0.0
        %617 = vmatprep.subr.mxu0 0.0
        %618 = vmatpush1.msra.mxu0 0.0
        %619 = vmatprep.subr.mxu0 0.0
        %620 = vmatpush1.msra.mxu0 0.0
        %621 = vmatprep.subr.mxu0 0.0
        %622 = vmatpush1.msra.mxu0 0.0
        %623 = vmatprep.subr.mxu0 0.0
        %624 = vmatpush1.msra.mxu0 0.0
        %625 = vmatprep.subr.mxu0 0.0
        %626 = vmatpush1.msra.mxu0 0.0
        %627 = vmatprep.subr.mxu0 0.0
        %628 = vmatpush1.msra.mxu0 %v438
        %629 = vmatprep.subr.mxu0 0.0
        %630 = vmatpush1.msra.mxu0 %v437
        %631 = vmatprep.subr.mxu0 0.0
        %632 = vmatpush2.msra.mxu0 0.0
        %633 = vmatprep.subr.mxu0 0.0
        %634 = vmatpush2.msra.mxu0 0.0
        %635 = vmatprep.subr.mxu0 0.0
        %636 = vmatpush2.msra.mxu0 0.0
        %637 = vmatprep.subr.mxu0 0.0
        %638 = vmatpush2.msra.mxu0 0.0
        %639 = vmatprep.subr.mxu0 0.0
        %640 = vmatpush2.msra.mxu0 0.0
        %641 = vmatprep.subr.mxu0 0.0
        %642 = vmatpush2.msra.mxu0 0.0
        %643 = vmatprep.subr.mxu0 0.0
        %644 = vmatpush2.msra.mxu0 0.0
        %645 = vmatprep.subr.mxu0 0.0
        %646 = vmatpush2.msra.mxu0 0.0
        %647 = vmatprep.subr.mxu0 0.0
        %648 = vmatpush2.msra.mxu0 0.0
        %649 = vmatprep.subr.mxu0 0.0
        %650 = vmatpush2.msra.mxu0 0.0
        %651 = vmatprep.subr.mxu0 0.0
        %652 = vmatpush2.msra.mxu0 0.0
        %653 = vmatprep.subr.mxu0 0.0
        %654 = vmatpush2.msra.mxu0 0.0
        %655 = vmatprep.subr.mxu0 0.0
        %656 = vmatpush2.msra.mxu0 0.0
        %657 = vmatprep.subr.mxu0 0.0
        %658 = vmatpush2.msra.mxu0 0.0
        %659 = vmatprep.subr.mxu0 0.0
        %660 = vmatpush2.msra.mxu0 0.0
        %661 = vmatprep.subr.mxu0 0.0
        %662 = vmatpush2.msra.mxu0 0.0
        %663 = vmatprep.mubr.f32.mxu0 0.0
        %664 = vmatmul.mubr.f32.gmra.mxu0 %v444
        %v665 = vpop.f32.mrf.mxu0
        %v666 = vadd.f32 0.0, %v665
        %v667 = vpop.f32.mrf.mxu0
        %668 = vmatprep.mubr.f32.mxu0 0.0
        %669 = vmatmul.mubr.f32.gmra.mxu0 %v447
        %v670 = vpop.f32.mrf.mxu0
        %v671 = vadd.f32 0.0, %v670
        %v672 = vpop.f32.mrf.mxu0
        %673 = vdwg.mxu0
        %674 = vmatprep.subr.mxu0 0.0
        %675 = vmatpush1.msra.mxu0 0.0
        %676 = vmatprep.subr.mxu0 0.0
        %677 = vmatpush1.msra.mxu0 0.0
        %678 = vmatprep.subr.mxu0 0.0
        %679 = vmatpush1.msra.mxu0 0.0
        %680 = vmatprep.subr.mxu0 0.0
        %681 = vmatpush1.msra.mxu0 0.0
        %682 = vmatprep.subr.mxu0 0.0
        %683 = vmatpush1.msra.mxu0 0.0
        %684 = vmatprep.subr.mxu0 0.0
        %685 = vmatpush1.msra.mxu0 0.0
        %686 = vmatprep.subr.mxu0 0.0
        %687 = vmatpush1.msra.mxu0 0.0
        %688 = vmatprep.subr.mxu0 0.0
        %689 = vmatpush1.msra.mxu0 0.0
        %690 = vmatprep.subr.mxu0 0.0
        %691 = vmatpush1.msra.mxu0 0.0
        %692 = vmatprep.subr.mxu0 0.0
        %693 = vmatpush1.msra.mxu0 0.0
        %694 = vmatprep.subr.mxu0 0.0
        %695 = vmatpush1.msra.mxu0 0.0
        %696 = vmatprep.subr.mxu0 0.0
        %697 = vmatpush1.msra.mxu0 0.0
        %698 = vmatprep.subr.mxu0 0.0
        %699 = vmatpush1.msra.mxu0 0.0
        %700 = vmatprep.subr.mxu0 0.0
        %701 = vmatpush1.msra.mxu0 0.0
        %702 = vmatprep.subr.mxu0 0.0
        %703 = vmatpush1.msra.mxu0 %v440
        %704 = vmatprep.subr.mxu0 0.0
        %705 = vmatpush1.msra.mxu0 %v439
        %706 = vmatprep.subr.mxu0 0.0
        %707 = vmatpush2.msra.mxu0 0.0
        %708 = vmatprep.subr.mxu0 0.0
        %709 = vmatpush2.msra.mxu0 0.0
        %710 = vmatprep.subr.mxu0 0.0
        %711 = vmatpush2.msra.mxu0 0.0
        %712 = vmatprep.subr.mxu0 0.0
        %713 = vmatpush2.msra.mxu0 0.0
        %714 = vmatprep.subr.mxu0 0.0
        %715 = vmatpush2.msra.mxu0 0.0
        %716 = vmatprep.subr.mxu0 0.0
        %717 = vmatpush2.msra.mxu0 0.0
        %718 = vmatprep.subr.mxu0 0.0
        %719 = vmatpush2.msra.mxu0 0.0
        %720 = vmatprep.subr.mxu0 0.0
        %721 = vmatpush2.msra.mxu0 0.0
        %722 = vmatprep.subr.mxu0 0.0
        %723 = vmatpush2.msra.mxu0 0.0
        %724 = vmatprep.subr.mxu0 0.0
        %725 = vmatpush2.msra.mxu0 0.0
        %726 = vmatprep.subr.mxu0 0.0
        %727 = vmatpush2.msra.mxu0 0.0
        %728 = vmatprep.subr.mxu0 0.0
        %729 = vmatpush2.msra.mxu0 0.0
        %730 = vmatprep.subr.mxu0 0.0
        %731 = vmatpush2.msra.mxu0 0.0
        %732 = vmatprep.subr.mxu0 0.0
        %733 = vmatpush2.msra.mxu0 0.0
        %734 = vmatprep.subr.mxu0 0.0
        %735 = vmatpush2.msra.mxu0 0.0
        %736 = vmatprep.subr.mxu0 0.0
        %737 = vmatpush2.msra.mxu0 0.0
        %738 = vmatprep.mubr.f32.mxu0 0.0
        %739 = vmatmul.mubr.f32.gmra.mxu0 %v444
        %v740 = vpop.f32.mrf.mxu0
        %v741 = vadd.f32 0.0, %v740
        %v742 = vpop.f32.mrf.mxu0
        %743 = vmatprep.mubr.f32.mxu0 0.0
        %744 = vmatmul.mubr.f32.gmra.mxu0 %v447
        %v745 = vpop.f32.mrf.mxu0
        %v746 = vadd.f32 0.0, %v745
        %v747 = vpop.f32.mrf.mxu0
        %748 = vdwg.mxu0
        %v749 = vld [vmem:[%s2] sm:$0xff]
        %v750 = vld [vmem:[%s2 + $0x8] sm:$0xff]
        %v752 = vsel %vm335, %v516, 0
        %v755 = vsel %vm335, %v521, 0
        %v758 = vsel %vm335, %v591, 0
        %v761 = vsel %vm335, %v596, 0
        %v764 = vsel %vm335, %v666, 0
        %v767 = vsel %vm335, %v671, 0
        %v770 = vsel %vm335, %v741, 0
        %v773 = vsel %vm335, %v746, 0
        %775 = vmatprep.subr.mxu0 0.0
        %776 = vmatpush1.msra.mxu0 0.0
        %777 = vmatprep.subr.mxu0 0.0
        %778 = vmatpush1.msra.mxu0 0.0
        %779 = vmatprep.subr.mxu0 0.0
        %780 = vmatpush1.msra.mxu0 0.0
        %781 = vmatprep.subr.mxu0 0.0
        %782 = vmatpush1.msra.mxu0 0.0
        %783 = vmatprep.subr.mxu0 0.0
        %784 = vmatpush1.msra.mxu0 0.0
        %785 = vmatprep.subr.mxu0 0.0
        %786 = vmatpush1.msra.mxu0 0.0
        %787 = vmatprep.subr.mxu0 0.0
        %788 = vmatpush1.msra.mxu0 0.0
        %789 = vmatprep.subr.mxu0 0.0
        %790 = vmatpush1.msra.mxu0 0.0
        %791 = vmatprep.subr.mxu0 0.0
        %792 = vmatpush1.msra.mxu0 0.0
        %793 = vmatprep.subr.mxu0 0.0
        %794 = vmatpush1.msra.mxu0 0.0
        %795 = vmatprep.subr.mxu0 0.0
        %796 = vmatpush1.msra.mxu0 0.0
        %797 = vmatprep.subr.mxu0 0.0
        %798 = vmatpush1.msra.mxu0 0.0
        %799 = vmatprep.subr.mxu0 0.0
        %800 = vmatpush1.msra.mxu0 0.0
        %801 = vmatprep.subr.mxu0 0.0
        %802 = vmatpush1.msra.mxu0 0.0
        %803 = vmatprep.subr.mxu0 0.0
        %804 = vmatpush1.msra.mxu0 %v750
        %805 = vmatprep.subr.mxu0 0.0
        %806 = vmatpush1.msra.mxu0 %v749
        %807 = vmatprep.subr.mxu0 0.0
        %808 = vmatpush2.msra.mxu0 0.0
        %809 = vmatprep.subr.mxu0 0.0
        %810 = vmatpush2.msra.mxu0 0.0
        %811 = vmatprep.subr.mxu0 0.0
        %812 = vmatpush2.msra.mxu0 0.0
        %813 = vmatprep.subr.mxu0 0.0
        %814 = vmatpush2.msra.mxu0 0.0
        %815 = vmatprep.subr.mxu0 0.0
        %816 = vmatpush2.msra.mxu0 0.0
        %817 = vmatprep.subr.mxu0 0.0
        %818 = vmatpush2.msra.mxu0 0.0
        %819 = vmatprep.subr.mxu0 0.0
        %820 = vmatpush2.msra.mxu0 0.0
        %821 = vmatprep.subr.mxu0 0.0
        %822 = vmatpush2.msra.mxu0 0.0
        %823 = vmatprep.subr.mxu0 0.0
        %824 = vmatpush2.msra.mxu0 0.0
        %825 = vmatprep.subr.mxu0 0.0
        %826 = vmatpush2.msra.mxu0 0.0
        %827 = vmatprep.subr.mxu0 0.0
        %828 = vmatpush2.msra.mxu0 0.0
        %829 = vmatprep.subr.mxu0 0.0
        %830 = vmatpush2.msra.mxu0 0.0
        %831 = vmatprep.subr.mxu0 0.0
        %832 = vmatpush2.msra.mxu0 0.0
        %833 = vmatprep.subr.mxu0 0.0
        %834 = vmatpush2.msra.mxu0 0.0
        %835 = vmatprep.subr.mxu0 0.0
        %836 = vmatpush2.msra.mxu0 0.0
        %837 = vmatprep.subr.mxu0 0.0
        %838 = vmatpush2.msra.mxu0 0.0
        %839 = vmatprep.mubr.f32.mxu0 0.0
        %840 = vmatmul.mubr.f32.gmra.mxu0 %v752
        %v841 = vpop.f32.mrf.mxu0
        %v842 = vadd.f32 0.0, %v841
        %v843 = vpop.f32.mrf.mxu0
        %844 = vmatprep.mubr.f32.mxu0 0.0
        %845 = vmatmul.mubr.f32.gmra.mxu0 %v755
        %v846 = vpop.f32.mrf.mxu0
        %v847 = vadd.f32 0.0, %v846
        %v848 = vpop.f32.mrf.mxu0
        %849 = vmatprep.mubr.f32.mxu0 0.0
        %850 = vmatmul.mubr.f32.gmra.mxu0 %v758
        %v851 = vpop.f32.mrf.mxu0
        %v852 = vadd.f32 0.0, %v851
        %v853 = vpop.f32.mrf.mxu0
        %854 = vmatprep.mubr.f32.mxu0 0.0
        %855 = vmatmul.mubr.f32.gmra.mxu0 %v761
        %v856 = vpop.f32.mrf.mxu0
        %v857 = vadd.f32 0.0, %v856
        %v858 = vpop.f32.mrf.mxu0
        %859 = vmatprep.mubr.f32.mxu0 0.0
        %860 = vmatmul.mubr.f32.gmra.mxu0 %v764
        %v861 = vpop.f32.mrf.mxu0
        %v862 = vadd.f32 0.0, %v861
        %v863 = vpop.f32.mrf.mxu0
        %864 = vmatprep.mubr.f32.mxu0 0.0
        %865 = vmatmul.mubr.f32.gmra.mxu0 %v767
        %v866 = vpop.f32.mrf.mxu0
        %v867 = vadd.f32 0.0, %v866
        %v868 = vpop.f32.mrf.mxu0
        %869 = vmatprep.mubr.f32.mxu0 0.0
        %870 = vmatmul.mubr.f32.gmra.mxu0 %v770
        %v871 = vpop.f32.mrf.mxu0
        %v872 = vadd.f32 0.0, %v871
        %v873 = vpop.f32.mrf.mxu0
        %874 = vmatprep.mubr.f32.mxu0 0.0
        %875 = vmatmul.mubr.f32.gmra.mxu0 %v773
        %v876 = vpop.f32.mrf.mxu0
        %v877 = vadd.f32 0.0, %v876
        %v878 = vpop.f32.mrf.mxu0
        %879 = vdwg.mxu0
        %v880 = vld [vmem:[%s3] sm:$0xff]
        %v881 = vld [vmem:[%s3 + $0x8] sm:$0xff]
        %v882 = vmul.f32 %v842, %v880
        %v883 = vmul.f32 %v847, %v881
        %v884 = vmul.f32 %v852, %v880
        %v885 = vmul.f32 %v857, %v881
        %v886 = vmul.f32 %v862, %v880
        %v887 = vmul.f32 %v867, %v881
        %v888 = vmul.f32 %v872, %v880
        %v889 = vmul.f32 %v877, %v881
        %v890 = vsub.f32 %v882, %v433
        %v891 = vsub.f32 %v883, %v434
        %v892 = vsub.f32 %v884, %v435
        %v893 = vsub.f32 %v885, %v436
        %v894 = vsub.f32 %v886, %v437
        %v895 = vsub.f32 %v887, %v438
        %v896 = vsub.f32 %v888, %v439
        %v897 = vsub.f32 %v889, %v440
        %v898 = vadd.f32 %v327, %v890
        %v899 = vadd.f32 %v328, %v891
        %v900 = vadd.f32 %v329, %v892
        %v901 = vadd.f32 %v330, %v893
        %v902 = vadd.f32 %v331, %v894
        %v903 = vadd.f32 %v332, %v895
        %v904 = vadd.f32 %v333, %v896
        %v905 = vadd.f32 %v334, %v897
        %v906 = vsel %vm335, %v898, 0.0
        %907 = vadd.xlane.f32.xlu0 %v906
        %v908 = vpop.xlane.xlu0 %907
        %v909 = vsel %vm335, %v899, 0.0
        %910 = vadd.xlane.f32.xlu0 %v909
        %v911 = vpop.xlane.xlu0 %910
        %v912 = vsel %vm335, %v900, 0.0
        %913 = vadd.xlane.f32.xlu0 %v912
        %v914 = vpop.xlane.xlu0 %913
        %v915 = vsel %vm335, %v901, 0.0
        %916 = vadd.xlane.f32.xlu0 %v915
        %v917 = vpop.xlane.xlu0 %916
        %v918 = vsel %vm335, %v902, 0.0
        %919 = vadd.xlane.f32.xlu0 %v918
        %v920 = vpop.xlane.xlu0 %919
        %v921 = vsel %vm335, %v903, 0.0
        %922 = vadd.xlane.f32.xlu0 %v921
        %v923 = vpop.xlane.xlu0 %922
        %v924 = vsel %vm335, %v904, 0.0
        %925 = vadd.xlane.f32.xlu0 %v924
        %v926 = vpop.xlane.xlu0 %925
        %v927 = vsel %vm335, %v905, 0.0
        %928 = vadd.xlane.f32.xlu0 %v927
        %v929 = vpop.xlane.xlu0 %928
        %v930 = vmul.f32 %v908, %v360
        %v931 = vmul.f32 %v911, %v360
        %v932 = vmul.f32 %v914, %v360
        %v933 = vmul.f32 %v917, %v360
        %v934 = vmul.f32 %v920, %v360
        %v935 = vmul.f32 %v923, %v360
        %v936 = vmul.f32 %v926, %v360
        %v937 = vmul.f32 %v929, %v360
        %v938 = vsub.f32 %v898, %v930
        %v939 = vsub.f32 %v899, %v931
        %v940 = vsub.f32 %v900, %v932
        %v941 = vsub.f32 %v901, %v933
        %v942 = vsub.f32 %v902, %v934
        %v943 = vsub.f32 %v903, %v935
        %v944 = vsub.f32 %v904, %v936
        %v945 = vsub.f32 %v905, %v937
        %v946 = vmul.f32 %v938, %v938
        %v947 = vmul.f32 %v939, %v939
        %v948 = vmul.f32 %v940, %v940
        %v949 = vmul.f32 %v941, %v941
        %v950 = vmul.f32 %v942, %v942
        %v951 = vmul.f32 %v943, %v943
        %v952 = vmul.f32 %v944, %v944
        %v953 = vmul.f32 %v945, %v945
        %v954 = vsel %vm335, %v946, 0.0
        %955 = vadd.xlane.f32.xlu0 %v954
        %v956 = vpop.xlane.xlu0 %955
        %v957 = vsel %vm335, %v947, 0.0
        %958 = vadd.xlane.f32.xlu0 %v957
        %v959 = vpop.xlane.xlu0 %958
        %v960 = vsel %vm335, %v948, 0.0
        %961 = vadd.xlane.f32.xlu0 %v960
        %v962 = vpop.xlane.xlu0 %961
        %v963 = vsel %vm335, %v949, 0.0
        %964 = vadd.xlane.f32.xlu0 %v963
        %v965 = vpop.xlane.xlu0 %964
        %v966 = vsel %vm335, %v950, 0.0
        %967 = vadd.xlane.f32.xlu0 %v966
        %v968 = vpop.xlane.xlu0 %967
        %v969 = vsel %vm335, %v951, 0.0
        %970 = vadd.xlane.f32.xlu0 %v969
        %v971 = vpop.xlane.xlu0 %970
        %v972 = vsel %vm335, %v952, 0.0
        %973 = vadd.xlane.f32.xlu0 %v972
        %v974 = vpop.xlane.xlu0 %973
        %v975 = vsel %vm335, %v953, 0.0
        %976 = vadd.xlane.f32.xlu0 %v975
        %v977 = vpop.xlane.xlu0 %976
        %v978 = vmul.f32 %v956, %v360
        %v979 = vmul.f32 %v959, %v360
        %v980 = vmul.f32 %v962, %v360
        %v981 = vmul.f32 %v965, %v360
        %v982 = vmul.f32 %v968, %v360
        %v983 = vmul.f32 %v971, %v360
        %v984 = vmul.f32 %v974, %v360
        %v985 = vmul.f32 %v977, %v360
        %v986 = vadd.f32 %v978, 1e-05
        %v987 = vadd.f32 %v979, 1e-05
        %v988 = vadd.f32 %v980, 1e-05
        %v989 = vadd.f32 %v981, 1e-05
        %v990 = vadd.f32 %v982, 1e-05
        %v991 = vadd.f32 %v983, 1e-05
        %v992 = vadd.f32 %v984, 1e-05
        %v993 = vadd.f32 %v985, 1e-05
        %v994 = vrsqrt.pop %v986
        %v995 = vrsqrt.pop %v987
        %v996 = vrsqrt.pop %v988
        %v997 = vrsqrt.pop %v989
        %v998 = vrsqrt.pop %v990
        %v999 = vrsqrt.pop %v991
        %v1000 = vrsqrt.pop %v992
        %v1001 = vrsqrt.pop %v993
        %v1002 = vmul.f32 %v938, %v994
        %v1003 = vmul.f32 %v939, %v995
        %v1004 = vmul.f32 %v940, %v996
        %v1005 = vmul.f32 %v941, %v997
        %v1006 = vmul.f32 %v942, %v998
        %v1007 = vmul.f32 %v943, %v999
        %v1008 = vmul.f32 %v944, %v1000
        %v1009 = vmul.f32 %v945, %v1001
        %v1010 = vld [vmem:[%s4] sm:$0xff]
        %v1011 = vld [vmem:[%s4 + $0x8] sm:$0xff]
        %v1012 = vld [vmem:[%s5] sm:$0x1]
        %v1014 = vlaneseq
        %v1015 = vshrl.u32 %v1014, 7
        %v1016 = vsub.s32 0, %v1015
        %v1017 = vrot.slane %v1012, %v1016
        %v1020 = vsel %vm335, %v1002, 0
        %v1023 = vsel %vm335, %v1003, 0
        %v1026 = vsel %vm335, %v1004, 0
        %v1029 = vsel %vm335, %v1005, 0
        %v1032 = vsel %vm335, %v1006, 0
        %v1035 = vsel %vm335, %v1007, 0
        %v1038 = vsel %vm335, %v1008, 0
        %v1041 = vsel %vm335, %v1009, 0
        %1043 = vmatprep.subr.mxu0 0.0
        %1044 = vmatpush1.msra.mxu0 0.0
        %1045 = vmatprep.subr.mxu0 0.0
        %1046 = vmatpush1.msra.mxu0 0.0
        %1047 = vmatprep.subr.mxu0 0.0
        %1048 = vmatpush1.msra.mxu0 0.0
        %1049 = vmatprep.subr.mxu0 0.0
        %1050 = vmatpush1.msra.mxu0 0.0
        %1051 = vmatprep.subr.mxu0 0.0
        %1052 = vmatpush1.msra.mxu0 0.0
        %1053 = vmatprep.subr.mxu0 0.0
        %1054 = vmatpush1.msra.mxu0 0.0
        %1055 = vmatprep.subr.mxu0 0.0
        %1056 = vmatpush1.msra.mxu0 0.0
        %1057 = vmatprep.subr.mxu0 0.0
        %1058 = vmatpush1.msra.mxu0 0.0
        %1059 = vmatprep.subr.mxu0 0.0
        %1060 = vmatpush1.msra.mxu0 0.0
        %1061 = vmatprep.subr.mxu0 0.0
        %1062 = vmatpush1.msra.mxu0 0.0
        %1063 = vmatprep.subr.mxu0 0.0
        %1064 = vmatpush1.msra.mxu0 0.0
        %1065 = vmatprep.subr.mxu0 0.0
        %1066 = vmatpush1.msra.mxu0 0.0
        %1067 = vmatprep.subr.mxu0 0.0
        %1068 = vmatpush1.msra.mxu0 0.0
        %1069 = vmatprep.subr.mxu0 0.0
        %1070 = vmatpush1.msra.mxu0 0.0
        %1071 = vmatprep.subr.mxu0 0.0
        %1072 = vmatpush1.msra.mxu0 %v1011
        %1073 = vmatprep.subr.mxu0 0.0
        %1074 = vmatpush1.msra.mxu0 %v1010
        %1075 = vmatprep.subr.mxu0 0.0
        %1076 = vmatpush2.msra.mxu0 0.0
        %1077 = vmatprep.subr.mxu0 0.0
        %1078 = vmatpush2.msra.mxu0 0.0
        %1079 = vmatprep.subr.mxu0 0.0
        %1080 = vmatpush2.msra.mxu0 0.0
        %1081 = vmatprep.subr.mxu0 0.0
        %1082 = vmatpush2.msra.mxu0 0.0
        %1083 = vmatprep.subr.mxu0 0.0
        %1084 = vmatpush2.msra.mxu0 0.0
        %1085 = vmatprep.subr.mxu0 0.0
        %1086 = vmatpush2.msra.mxu0 0.0
        %1087 = vmatprep.subr.mxu0 0.0
        %1088 = vmatpush2.msra.mxu0 0.0
        %1089 = vmatprep.subr.mxu0 0.0
        %1090 = vmatpush2.msra.mxu0 0.0
        %1091 = vmatprep.subr.mxu0 0.0
        %1092 = vmatpush2.msra.mxu0 0.0
        %1093 = vmatprep.subr.mxu0 0.0
        %1094 = vmatpush2.msra.mxu0 0.0
        %1095 = vmatprep.subr.mxu0 0.0
        %1096 = vmatpush2.msra.mxu0 0.0
        %1097 = vmatprep.subr.mxu0 0.0
        %1098 = vmatpush2.msra.mxu0 0.0
        %1099 = vmatprep.subr.mxu0 0.0
        %1100 = vmatpush2.msra.mxu0 0.0
        %1101 = vmatprep.subr.mxu0 0.0
        %1102 = vmatpush2.msra.mxu0 0.0
        %1103 = vmatprep.subr.mxu0 0.0
        %1104 = vmatpush2.msra.mxu0 0.0
        %1105 = vmatprep.subr.mxu0 0.0
        %1106 = vmatpush2.msra.mxu0 0.0
        %1107 = vmatprep.mubr.f32.mxu0 0.0
        %1108 = vmatmul.mubr.f32.gmra.mxu0 %v1020
        %v1109 = vpop.f32.mrf.mxu0
        %v1110 = vadd.f32 %v1017, %v1109
        %v1111 = vpop.f32.mrf.mxu0
        %1112 = vmatprep.mubr.f32.mxu0 0.0
        %1113 = vmatmul.mubr.f32.gmra.mxu0 %v1023
        %v1114 = vpop.f32.mrf.mxu0
        %v1115 = vadd.f32 %v1017, %v1114
        %v1116 = vpop.f32.mrf.mxu0
        %1117 = vmatprep.mubr.f32.mxu0 0.0
        %1118 = vmatmul.mubr.f32.gmra.mxu0 %v1026
        %v1119 = vpop.f32.mrf.mxu0
        %v1120 = vadd.f32 %v1017, %v1119
        %v1121 = vpop.f32.mrf.mxu0
        %1122 = vmatprep.mubr.f32.mxu0 0.0
        %1123 = vmatmul.mubr.f32.gmra.mxu0 %v1029
        %v1124 = vpop.f32.mrf.mxu0
        %v1125 = vadd.f32 %v1017, %v1124
        %v1126 = vpop.f32.mrf.mxu0
        %1127 = vmatprep.mubr.f32.mxu0 0.0
        %1128 = vmatmul.mubr.f32.gmra.mxu0 %v1032
        %v1129 = vpop.f32.mrf.mxu0
        %v1130 = vadd.f32 %v1017, %v1129
        %v1131 = vpop.f32.mrf.mxu0
        %1132 = vmatprep.mubr.f32.mxu0 0.0
        %1133 = vmatmul.mubr.f32.gmra.mxu0 %v1035
        %v1134 = vpop.f32.mrf.mxu0
        %v1135 = vadd.f32 %v1017, %v1134
        %v1136 = vpop.f32.mrf.mxu0
        %1137 = vmatprep.mubr.f32.mxu0 0.0
        %1138 = vmatmul.mubr.f32.gmra.mxu0 %v1038
        %v1139 = vpop.f32.mrf.mxu0
        %v1140 = vadd.f32 %v1017, %v1139
        %v1141 = vpop.f32.mrf.mxu0
        %1142 = vmatprep.mubr.f32.mxu0 0.0
        %1143 = vmatmul.mubr.f32.gmra.mxu0 %v1041
        %v1144 = vpop.f32.mrf.mxu0
        %v1145 = vadd.f32 %v1017, %v1144
        %v1146 = vpop.f32.mrf.mxu0
        %1147 = vdwg.mxu0
        %v1148 = vmul.f32 %v1110, 0.5
        %v1149 = vmul.f32 %v1115, 0.5
        %v1150 = vmul.f32 %v1120, 0.5
        %v1151 = vmul.f32 %v1125, 0.5
        %v1152 = vmul.f32 %v1130, 0.5
        %v1153 = vmul.f32 %v1135, 0.5
        %v1154 = vmul.f32 %v1140, 0.5
        %v1155 = vmul.f32 %v1145, 0.5
        %v1156 = vmul.f32 %v1110, 0.044715
        %v1157 = vmul.f32 %v1115, 0.044715
        %v1158 = vmul.f32 %v1120, 0.044715
        %v1159 = vmul.f32 %v1125, 0.044715
        %v1160 = vmul.f32 %v1130, 0.044715
        %v1161 = vmul.f32 %v1135, 0.044715
        %v1162 = vmul.f32 %v1140, 0.044715
        %v1163 = vmul.f32 %v1145, 0.044715
        %v1164 = vmul.f32 %v1156, %v1110
        %v1165 = vmul.f32 %v1157, %v1115
        %v1166 = vmul.f32 %v1158, %v1120
        %v1167 = vmul.f32 %v1159, %v1125
        %v1168 = vmul.f32 %v1160, %v1130
        %v1169 = vmul.f32 %v1161, %v1135
        %v1170 = vmul.f32 %v1162, %v1140
        %v1171 = vmul.f32 %v1163, %v1145
        %v1172 = vmul.f32 %v1164, %v1110
        %v1173 = vmul.f32 %v1165, %v1115
        %v1174 = vmul.f32 %v1166, %v1120
        %v1175 = vmul.f32 %v1167, %v1125
        %v1176 = vmul.f32 %v1168, %v1130
        %v1177 = vmul.f32 %v1169, %v1135
        %v1178 = vmul.f32 %v1170, %v1140
        %v1179 = vmul.f32 %v1171, %v1145
        %v1180 = vadd.f32 %v1110, %v1172
        %v1181 = vadd.f32 %v1115, %v1173
        %v1182 = vadd.f32 %v1120, %v1174
        %v1183 = vadd.f32 %v1125, %v1175
        %v1184 = vadd.f32 %v1130, %v1176
        %v1185 = vadd.f32 %v1135, %v1177
        %v1186 = vadd.f32 %v1140, %v1178
        %v1187 = vadd.f32 %v1145, %v1179
        %v1188 = vmul.f32 %v1180, 0.7978846
        %v1189 = vmul.f32 %v1181, 0.7978846
        %v1190 = vmul.f32 %v1182, 0.7978846
        %v1191 = vmul.f32 %v1183, 0.7978846
        %v1192 = vmul.f32 %v1184, 0.7978846
        %v1193 = vmul.f32 %v1185, 0.7978846
        %v1194 = vmul.f32 %v1186, 0.7978846
        %v1195 = vmul.f32 %v1187, 0.7978846
        %v1196 = vtanh.pop %v1188
        %v1197 = vtanh.pop %v1189
        %v1198 = vtanh.pop %v1190
        %v1199 = vtanh.pop %v1191
        %v1200 = vtanh.pop %v1192
        %v1201 = vtanh.pop %v1193
        %v1202 = vtanh.pop %v1194
        %v1203 = vtanh.pop %v1195
        %v1204 = vadd.f32 %v1196, 1.0
        %v1205 = vadd.f32 %v1197, 1.0
        %v1206 = vadd.f32 %v1198, 1.0
        %v1207 = vadd.f32 %v1199, 1.0
        %v1208 = vadd.f32 %v1200, 1.0
        %v1209 = vadd.f32 %v1201, 1.0
        %v1210 = vadd.f32 %v1202, 1.0
        %v1211 = vadd.f32 %v1203, 1.0
        %v1212 = vmul.f32 %v1148, %v1204
        %v1213 = vmul.f32 %v1149, %v1205
        %v1214 = vmul.f32 %v1150, %v1206
        %v1215 = vmul.f32 %v1151, %v1207
        %v1216 = vmul.f32 %v1152, %v1208
        %v1217 = vmul.f32 %v1153, %v1209
        %v1218 = vmul.f32 %v1154, %v1210
        %v1219 = vmul.f32 %v1155, %v1211
        %v1220 = vld [vmem:[%s6] sm:$0xff]
        %v1221 = vld [vmem:[%s6 + $0x8] sm:$0xff]
        %v1222 = vld [vmem:[%s6 + $0x10] sm:$0xff]
        %v1223 = vld [vmem:[%s6 + $0x18] sm:$0xff]
        %v1224 = vld [vmem:[%s6 + $0x20] sm:$0xff]
        %v1225 = vld [vmem:[%s6 + $0x28] sm:$0xff]
        %v1226 = vld [vmem:[%s6 + $0x30] sm:$0xff]
        %v1227 = vld [vmem:[%s6 + $0x38] sm:$0xff]
        %vm1228 = vcmask 523264
        %v1230 = vsel %vm1228, %v1212, 0
        %v1233 = vsel %vm1228, %v1213, 0
        %v1236 = vsel %vm1228, %v1214, 0
        %v1239 = vsel %vm1228, %v1215, 0
        %v1242 = vsel %vm1228, %v1216, 0
        %v1245 = vsel %vm1228, %v1217, 0
        %v1248 = vsel %vm1228, %v1218, 0
        %v1251 = vsel %vm1228, %v1219, 0
        %1253 = vmatprep.subr.mxu0 0.0
        %1254 = vmatpush1.msra.mxu0 0.0
        %1255 = vmatprep.subr.mxu0 0.0
        %1256 = vmatpush1.msra.mxu0 0.0
        %1257 = vmatprep.subr.mxu0 0.0
        %1258 = vmatpush1.msra.mxu0 0.0
        %1259 = vmatprep.subr.mxu0 0.0
        %1260 = vmatpush1.msra.mxu0 0.0
        %1261 = vmatprep.subr.mxu0 0.0
        %1262 = vmatpush1.msra.mxu0 0.0
        %1263 = vmatprep.subr.mxu0 0.0
        %1264 = vmatpush1.msra.mxu0 0.0
        %1265 = vmatprep.subr.mxu0 0.0
        %1266 = vmatpush1.msra.mxu0 0.0
        %1267 = vmatprep.subr.mxu0 0.0
        %1268 = vmatpush1.msra.mxu0 0.0
        %1269 = vmatprep.subr.mxu0 0.0
        %1270 = vmatpush1.msra.mxu0 %v1227
        %1271 = vmatprep.subr.mxu0 0.0
        %1272 = vmatpush1.msra.mxu0 %v1226
        %1273 = vmatprep.subr.mxu0 0.0
        %1274 = vmatpush1.msra.mxu0 %v1225
        %1275 = vmatprep.subr.mxu0 0.0
        %1276 = vmatpush1.msra.mxu0 %v1224
        %1277 = vmatprep.subr.mxu0 0.0
        %1278 = vmatpush1.msra.mxu0 %v1223
        %1279 = vmatprep.subr.mxu0 0.0
        %1280 = vmatpush1.msra.mxu0 %v1222
        %1281 = vmatprep.subr.mxu0 0.0
        %1282 = vmatpush1.msra.mxu0 %v1221
        %1283 = vmatprep.subr.mxu0 0.0
        %1284 = vmatpush1.msra.mxu0 %v1220
        %1285 = vmatprep.subr.mxu0 0.0
        %1286 = vmatpush2.msra.mxu0 0.0
        %1287 = vmatprep.subr.mxu0 0.0
        %1288 = vmatpush2.msra.mxu0 0.0
        %1289 = vmatprep.subr.mxu0 0.0
        %1290 = vmatpush2.msra.mxu0 0.0
        %1291 = vmatprep.subr.mxu0 0.0
        %1292 = vmatpush2.msra.mxu0 0.0
        %1293 = vmatprep.subr.mxu0 0.0
        %1294 = vmatpush2.msra.mxu0 0.0
        %1295 = vmatprep.subr.mxu0 0.0
        %1296 = vmatpush2.msra.mxu0 0.0
        %1297 = vmatprep.subr.mxu0 0.0
        %1298 = vmatpush2.msra.mxu0 0.0
        %1299 = vmatprep.subr.mxu0 0.0
        %1300 = vmatpush2.msra.mxu0 0.0
        %1301 = vmatprep.subr.mxu0 0.0
        %1302 = vmatpush2.msra.mxu0 0.0
        %1303 = vmatprep.subr.mxu0 0.0
        %1304 = vmatpush2.msra.mxu0 0.0
        %1305 = vmatprep.subr.mxu0 0.0
        %1306 = vmatpush2.msra.mxu0 0.0
        %1307 = vmatprep.subr.mxu0 0.0
        %1308 = vmatpush2.msra.mxu0 0.0
        %1309 = vmatprep.subr.mxu0 0.0
        %1310 = vmatpush2.msra.mxu0 0.0
        %1311 = vmatprep.subr.mxu0 0.0
        %1312 = vmatpush2.msra.mxu0 0.0
        %1313 = vmatprep.subr.mxu0 0.0
        %1314 = vmatpush2.msra.mxu0 0.0
        %1315 = vmatprep.subr.mxu0 0.0
        %1316 = vmatpush2.msra.mxu0 0.0
        %1317 = vmatprep.mubr.f32.mxu0 0.0
        %1318 = vmatmul.mubr.f32.gmra.mxu0 %v1230
        %v1319 = vpop.f32.mrf.mxu0
        %v1320 = vadd.f32 0.0, %v1319
        %v1321 = vpop.f32.mrf.mxu0
        %1322 = vmatprep.mubr.f32.mxu0 0.0
        %1323 = vmatmul.mubr.f32.gmra.mxu0 %v1233
        %v1324 = vpop.f32.mrf.mxu0
        %v1325 = vadd.f32 0.0, %v1324
        %v1326 = vpop.f32.mrf.mxu0
        %1327 = vmatprep.mubr.f32.mxu0 0.0
        %1328 = vmatmul.mubr.f32.gmra.mxu0 %v1236
        %v1329 = vpop.f32.mrf.mxu0
        %v1330 = vadd.f32 0.0, %v1329
        %v1331 = vpop.f32.mrf.mxu0
        %1332 = vmatprep.mubr.f32.mxu0 0.0
        %1333 = vmatmul.mubr.f32.gmra.mxu0 %v1239
        %v1334 = vpop.f32.mrf.mxu0
        %v1335 = vadd.f32 0.0, %v1334
        %v1336 = vpop.f32.mrf.mxu0
        %1337 = vmatprep.mubr.f32.mxu0 0.0
        %1338 = vmatmul.mubr.f32.gmra.mxu0 %v1242
        %v1339 = vpop.f32.mrf.mxu0
        %v1340 = vadd.f32 0.0, %v1339
        %v1341 = vpop.f32.mrf.mxu0
        %1342 = vmatprep.mubr.f32.mxu0 0.0
        %1343 = vmatmul.mubr.f32.gmra.mxu0 %v1245
        %v1344 = vpop.f32.mrf.mxu0
        %v1345 = vadd.f32 0.0, %v1344
        %v1346 = vpop.f32.mrf.mxu0
        %1347 = vmatprep.mubr.f32.mxu0 0.0
        %1348 = vmatmul.mubr.f32.gmra.mxu0 %v1248
        %v1349 = vpop.f32.mrf.mxu0
        %v1350 = vadd.f32 0.0, %v1349
        %v1351 = vpop.f32.mrf.mxu0
        %1352 = vmatprep.mubr.f32.mxu0 0.0
        %1353 = vmatmul.mubr.f32.gmra.mxu0 %v1251
        %v1354 = vpop.f32.mrf.mxu0
        %v1355 = vadd.f32 0.0, %v1354
        %v1356 = vpop.f32.mrf.mxu0
        %1357 = vdwg.mxu0
        %v1358 = vadd.f32 %v898, %v1320
        %v1359 = vadd.f32 %v899, %v1325
        %v1360 = vadd.f32 %v900, %v1330
        %v1361 = vadd.f32 %v901, %v1335
        %v1362 = vadd.f32 %v902, %v1340
        %v1363 = vadd.f32 %v903, %v1345
        %v1364 = vadd.f32 %v904, %v1350
        %v1365 = vadd.f32 %v905, %v1355
        %v1366 = vld [vmem:[%s7] sm:$0x1]
        %v1368 = vlaneseq
        %v1369 = vshrl.u32 %v1368, 7
        %v1370 = vsub.s32 0, %v1369
        %v1371 = vrot.slane %v1366, %v1370
        %v1373 = vadd.f32 %v1358, %v1371
        %v1374 = vadd.f32 %v1359, %v1371
        %v1375 = vadd.f32 %v1360, %v1371
        %v1376 = vadd.f32 %v1361, %v1371
        %v1377 = vadd.f32 %v1362, %v1371
        %v1378 = vadd.f32 %v1363, %v1371
        %v1379 = vadd.f32 %v1364, %v1371
        %v1380 = vadd.f32 %v1365, %v1371
        %1381 = vst.msk [vmem:[%s324] sm:$0xff] %vm335, %v1373
        %1382 = vst.msk [vmem:[%s324 + $0x8] sm:$0xff] %vm335, %v1374
        %1383 = vst.msk [vmem:[%s324 + $0x10] sm:$0xff] %vm335, %v1375
        %1384 = vst.msk [vmem:[%s324 + $0x18] sm:$0xff] %vm335, %v1376
        %1385 = vst.msk [vmem:[%s324 + $0x20] sm:$0xff] %vm335, %v1377
        %1386 = vst.msk [vmem:[%s324 + $0x28] sm:$0xff] %vm335, %v1378
        %1387 = vst.msk [vmem:[%s324 + $0x30] sm:$0xff] %vm335, %v1379
        %1388 = vst.msk [vmem:[%s324 + $0x38] sm:$0xff] %vm335, %v1380
        %s1389 = sand.u32 %s206, 1
        %s1390 = scalar_lea.sflag [#allocation4], %s1389
        %s1391 = sand.u32 %s206, 1
        %s1392 = smul.addr %s1391, 64
        %s1393 = scalar_lea.vmem [#allocation5], %s1392
        // Predicated region
        $region57: #{tpu_custom_call.1} parent=51 // pred_check
          %p1394 = pneg %p216
        $region58: #{tpu_custom_call.1} parent=51 // pred_check_branch
          %1396 = sbr.rel (%p1394) target = $region60
        $region59: #{tpu_custom_call.1} parent=51 // pred_region
          %s1397 = smul.u32 4, %s25
          %s1399 = ssub.s32 1024, 1024
          %1400 = vsyncadd %s1390, %s1399
          %s1401 = smul.addr %s1397, 2
          %s1402 = smul.addr %s1401, 128
          %s1403 = scalar_lea.hbm %s8, %s1402
          %s1404 = sshll.u32 %s1393, 4
          %s1405 = int_to_ptr.vmem [resolvable:$true] %s1404
          %1410 = dma.vmem_to_hbm [thread:$0]  %s1405, 1024, %s1403, %s1390, 128, 128, 8
        $region60: #{tpu_custom_call.1} parent=51 // pred_fallthru
          _
      $region52: #{tpu_custom_call.1} parent=5 // pred_fallthru
        _
      %p1411 = scmp.le.s32.totalorder 2, %s20
      // Predicated region
      $region61: #{tpu_custom_call.1} parent=5 // pred_check
        %p1412 = pneg %p1411
      $region62: #{tpu_custom_call.1} parent=5 // pred_check_branch
        %1414 = sbr.rel (%p1412) target = $region64
      $region63: #{tpu_custom_call.1} parent=5 // pred_region
        %s1415 = ssub.s32 %s20, 2
        // Predicated region
        $region65: #{tpu_custom_call.1} parent=63 // pred_check
          %p1416 = pneg %p222
        $region66: #{tpu_custom_call.1} parent=63 // pred_check_branch
          %1418 = sbr.rel (%p1416) target = $region68
        $region67: #{tpu_custom_call.1} parent=63 // pred_region
          %s1419 = sand.u32 %s207, 1
          %s1420 = scalar_lea.sflag [#allocation4], %s1419
          %s1421 = sand.u32 %s207, 1
          %s1422 = smul.addr %s1421, 64
          %s1423 = scalar_lea.vmem [#allocation5], %s1422
          %1424 = dma.done %s1420, 1024
        $region68: #{tpu_custom_call.1} parent=63 // pred_fallthru
          _
      $region64: #{tpu_custom_call.1} parent=5 // pred_fallthru
        _
    $region6: #{tpu_custom_call.1} parent=1 // loop_footer
      %s24 = sadd.s32 1, %s20
    $region7: #{tpu_custom_call.1} parent=1 // loop_footer_branch
      %19 = sbr.rel target = $region3
    $region8: #{tpu_custom_call.1} parent=1 // loop_exit
      _
    %1425 = vsyncpa [#allocation3], 1
    %s1426 = scalar_lea.sflag [#allocation3], 1
    %1427 = vsyncpa %s1426, 1
    %1428 = vsyncpa [#allocation4], 1
    %s1429 = scalar_lea.sflag [#allocation4], 1
    %1430 = vsyncpa %s1429, 1

</llo_original>
